<compile_context>
chip_gen: v5e
topology: v5e:2x2
jax: 0.10.0
libtpu: 0.0.40
codegen_flags: <defaults>
</compile_context>

<pallas_src>
import jax
import jax.numpy as jnp
from jax.experimental import pallas as pl
from jax.experimental.pallas import tpu as pltpu

EMBED_SIZE = 64
HIDDEN_SIZE = 128
SUBLANE = 8
LANE = 128


# ---------------------------------------------------------------------------
# Pallas kernel: whole forward (gather + recurrence + FC) in one invocation.
# ---------------------------------------------------------------------------
def _policy_kernel(seq_ref, xw_ref, whh_ref, wfc_ref, bfc_ref, out_ref, xp_ref):
    """
    seq_ref : SMEM (B*T,) int32   token ids, row-major (b * T + t)   [prefetch]
    xw_ref  : VMEM (Vp, 4H) f32   precomputed  embed @ W_ih^T + (b_ih + b_hh)
    whh_ref : VMEM (H, 4H)  bf16  W_hh^T
    wfc_ref : VMEM (H, Vo)  bf16  W_fc^T, lane-padded to Vo
    bfc_ref : VMEM (1, Vo)  f32   b_fc, lane-padded
    out_ref : VMEM (Bp, Vo) f32   logits (padded)
    xp_ref  : VMEM (T*Bp, 4H) f32 scratch: gathered per-step input projections
    """
    b_pad = out_ref.shape[0]
    hidden = whh_ref.shape[0]
    t_steps = xp_ref.shape[0] // b_pad
    batch = seq_ref.shape[0] // t_steps

    # ---- Gather phase -----------------------------------------------------
    # x_proj[t, b] is just row xw[token[b, t]]; pad rows stay zero (discarded
    # by the wrapper slice anyway).
    xp_ref[...] = jnp.zeros_like(xp_ref)
    for t in range(t_steps):
        for b in range(batch):
            tok = seq_ref[b * t_steps + t]
            xp_ref[pl.ds(t * b_pad + b, 1), :] = xw_ref[pl.ds(tok, 1), :]

    def sigmoid(x):
        # single EUP push (tanh) instead of exp + reciprocal
        return 0.5 * jnp.tanh(0.5 * x) + 0.5

    h = jnp.zeros((b_pad, hidden), jnp.float32)
    c = jnp.zeros((b_pad, hidden), jnp.float32)

    # ---- Recurrence (fully unrolled, T is small/static) --------------------
    # PyTorch LSTM gate layout along the 4H axis: [i, f, g, o].
    for t in range(t_steps):
        x_proj_t = xp_ref[pl.ds(t * b_pad, b_pad), :]                 # (Bp, 4H)
        gates = x_proj_t + jnp.dot(h.astype(jnp.bfloat16), whh_ref[...],
                                   preferred_element_type=jnp.float32)
        i_g = sigmoid(gates[:, 0 * hidden:1 * hidden])
        f_g = sigmoid(gates[:, 1 * hidden:2 * hidden])
        g_g = jnp.tanh(gates[:, 2 * hidden:3 * hidden])
        o_g = sigmoid(gates[:, 3 * hidden:4 * hidden])
        c = f_g * c + i_g * g_g
        h = o_g * jnp.tanh(c)

    # ---- Final FC on the last hidden state (lane-dense padded output) ------
    logits = (jnp.dot(h.astype(jnp.bfloat16), wfc_ref[...],
                      preferred_element_type=jnp.float32)
              + bfc_ref[...])
    out_ref[...] = logits.astype(out_ref.dtype)


# ---------------------------------------------------------------------------
# Wrapper: everything lives in one pallas_call; only two tiny lane-pads of the
# FC weight/bias remain on the XLA side.
# ---------------------------------------------------------------------------
@jax.jit
def policy_network_forward(seq, params):
    """seq: int32 (B, T) token ids. Returns float32 (B, vocab_size - 1)."""
    if seq.ndim == 1:
        seq = seq[None, :]

    xw = params["xw"]           # (Vp, 4H) f32   embed @ W_ih^T + bias
    whh = params["whh_t"]       # (H, 4H)  bf16
    wfc = params["wfc_t"]       # (H, V-1) bf16
    bfc = params["bfc"]         # (1, V-1) f32

    B, T = seq.shape
    H, G = whh.shape            # H, 4H
    Vp_tab = xw.shape[0]
    Vm1 = wfc.shape[1]

    B_pad = max(SUBLANE, -(-B // SUBLANE) * SUBLANE)
    V_pad = max(LANE, -(-Vm1 // LANE) * LANE)

    # Lane-pad the FC so the output store is lane-dense (unmasked vst).
    wfc_pad = jnp.pad(wfc, ((0, 0), (0, V_pad - Vm1)))
    bfc_pad = jnp.pad(bfc, ((0, 0), (0, V_pad - Vm1)))

    seq_flat = seq.reshape(-1).astype(jnp.int32)    # (B*T,) row-major b*T + t

    grid_spec = pltpu.PrefetchScalarGridSpec(
        num_scalar_prefetch=1,
        grid=(1,),
        in_specs=[
            pl.BlockSpec((Vp_tab, G), lambda i, s: (0, 0)),   # xw table
            pl.BlockSpec((H, G), lambda i, s: (0, 0)),        # W_hh^T (bf16)
            pl.BlockSpec((H, V_pad), lambda i, s: (0, 0)),    # W_fc^T (bf16, padded)
            pl.BlockSpec((1, V_pad), lambda i, s: (0, 0)),    # b_fc (padded)
        ],
        out_specs=pl.BlockSpec((B_pad, V_pad), lambda i, s: (0, 0)),
        scratch_shapes=[
            pltpu.VMEM((T * B_pad, G), jnp.float32),          # gathered x_proj
        ],
    )

    out = pl.pallas_call(
        _policy_kernel,
        out_shape=jax.ShapeDtypeStruct((B_pad, V_pad), jnp.float32),
        grid_spec=grid_spec,
        compiler_params=pltpu.CompilerParams(
            dimension_semantics=("arbitrary",)),
    )(seq_flat, xw, whh, wfc_pad, bfc_pad)

    return out[:B, :Vm1]


# ---------------------------------------------------------------------------
# Deterministic parameter initialization mimicking the PyTorch module, plus
# one-time folding of embedding + input projection into the xw table.
# ---------------------------------------------------------------------------
def init_params(key, vocab_size, embed_size=EMBED_SIZE, hidden_size=HIDDEN_SIZE):
    k_emb, k_wih, k_whh, k_bih, k_bhh, k_wfc = jax.random.split(key, 6)

    def xavier(k, shape):
        fan_out, fan_in = shape
        bound = (6.0 / (fan_in + fan_out)) ** 0.5
        return jax.random.uniform(k, shape, jnp.float32, -bound, bound)

    # nn.Embedding default: N(0,1); padding_idx=0 row zeroed.
    embed = jax.random.normal(k_emb, (vocab_size, embed_size), jnp.float32)
    embed = embed.at[0].set(0.0)

    # LSTM weights: xavier_uniform (dim > 1); biases keep default uniform init.
    w_ih = xavier(k_wih, (4 * hidden_size, embed_size))       # (4H, E)
    w_hh = xavier(k_whh, (4 * hidden_size, hidden_size))      # (4H, H)
    bnd = 1.0 / (hidden_size ** 0.5)
    b_ih = jax.random.uniform(k_bih, (4 * hidden_size,), jnp.float32, -bnd, bnd)
    b_hh = jax.random.uniform(k_bhh, (4 * hidden_size,), jnp.float32, -bnd, bnd)

    # fc: xavier_uniform weight, zero bias.
    w_fc = xavier(k_wfc, (vocab_size - 1, hidden_size))       # (V-1, H)
    b_fc = jnp.zeros((vocab_size - 1,), jnp.float32)

    # Fold embedding + input projection + bias: xw[v] = embed[v] @ W_ih^T + b.
    xw = embed @ w_ih.T + (b_ih + b_hh)[None, :]               # (V, 4H) f32
    v_pad = max(SUBLANE, -(-vocab_size // SUBLANE) * SUBLANE)
    xw = jnp.pad(xw, ((0, v_pad - vocab_size), (0, 0)))        # (Vp, 4H)

    return {
        "xw": xw.astype(jnp.float32),                          # (Vp, 4H) f32
        "whh_t": jnp.transpose(w_hh).astype(jnp.bfloat16),     # (H, 4H)  bf16
        "wfc_t": jnp.transpose(w_fc).astype(jnp.bfloat16),     # (H, V-1) bf16
        "bfc": b_fc[None, :].astype(jnp.float32),              # (1, V-1) f32
    }


if __name__ == "__main__":
    key = jax.random.PRNGKey(0)
    k_params, k_seq = jax.random.split(key)

    VOCAB = 12     # small vocab; output dim = vocab - 1 = 11
    B, T = 2, 8

    params = init_params(k_params, VOCAB)
    seq = jax.random.randint(k_seq, (B, T), 0, VOCAB, dtype=jnp.int32)

    logits = policy_network_forward(seq, params)
    jax.block_until_ready(logits)

    assert logits.shape == (B, VOCAB - 1)
    assert logits.dtype == jnp.float32
    assert bool(jnp.all(jnp.isfinite(logits)))
    print("KERNEL_OK")
</pallas_src>

<mosaic_0001>
module attributes {stable_mosaic.version = 11 : i64} {
  func.func @_policy_kernel(%arg0: i32, %arg1: memref<16xi32, #tpu.memory_space<smem>>, %arg2: memref<16x512xf32, #tpu.memory_space<vmem>>, %arg3: memref<128x512xbf16, #tpu.memory_space<vmem>>, %arg4: memref<128x128xbf16, #tpu.memory_space<vmem>>, %arg5: memref<1x128xf32, #tpu.memory_space<vmem>>, %arg6: memref<8x128xf32, #tpu.memory_space<vmem>>, %arg7: memref<64x512xf32, #tpu.memory_space<vmem>>) attributes {dimension_semantics = [#tpu.dimension_semantics<arbitrary>], iteration_bounds = array<i64: 1>, scalar_prefetch = 1 : i64, scratch_operands = 1 : i64, tpu.core_type = #tpu.core_type<tc>, window_params = [{pipeline_mode = #tpu.pipeline_mode<synchronous>, transform_indices = @transform_0, window_bounds = array<i64: 16, 512>}, {pipeline_mode = #tpu.pipeline_mode<synchronous>, transform_indices = @transform_1, window_bounds = array<i64: 128, 512>}, {pipeline_mode = #tpu.pipeline_mode<synchronous>, transform_indices = @transform_2, window_bounds = array<i64: 128, 128>}, {pipeline_mode = #tpu.pipeline_mode<synchronous>, transform_indices = @transform_3, window_bounds = array<i64: 1, 128>}, {pipeline_mode = #tpu.pipeline_mode<synchronous>, transform_indices = @transform_4, window_bounds = array<i64: 8, 128>}]} {
    %cst = arith.constant 0.000000e+00 : f32
    %0 = vector.broadcast %cst : f32 to vector<64x512xf32>
    %c0 = arith.constant 0 : index
    %c0_0 = arith.constant 0 : index
    %1 = vector.load %arg7[%c0, %c0_0] : memref<64x512xf32, #tpu.memory_space<vmem>>, vector<64x512xf32>
    tpu.vector_store %arg7[%c0, %c0_0], %0 {strides = array<i32>} : memref<64x512xf32, #tpu.memory_space<vmem>>, vector<64x512xf32>,
    %c0_1 = arith.constant 0 : index
    %2 = memref.load %arg1[%c0_1] : memref<16xi32, #tpu.memory_space<smem>>
    %3 = arith.index_cast %2 : i32 to index
    %c0_2 = arith.constant 0 : index
    %4 = vector.load %arg2[%3, %c0_2] : memref<16x512xf32, #tpu.memory_space<vmem>>, vector<1x512xf32>
    %c0_3 = arith.constant 0 : index
    %c0_4 = arith.constant 0 : index
    %5 = vector.load %arg7[%c0_3, %c0_4] : memref<64x512xf32, #tpu.memory_space<vmem>>, vector<1x512xf32>
    tpu.vector_store %arg7[%c0_3, %c0_4], %4 {strides = array<i32>} : memref<64x512xf32, #tpu.memory_space<vmem>>, vector<1x512xf32>,
    %c8 = arith.constant 8 : index
    %6 = memref.load %arg1[%c8] : memref<16xi32, #tpu.memory_space<smem>>
    %7 = arith.index_cast %6 : i32 to index
    %c0_5 = arith.constant 0 : index
    %8 = vector.load %arg2[%7, %c0_5] : memref<16x512xf32, #tpu.memory_space<vmem>>, vector<1x512xf32>
    %c1 = arith.constant 1 : index
    %c0_6 = arith.constant 0 : index
    %9 = vector.load %arg7[%c1, %c0_6] : memref<64x512xf32, #tpu.memory_space<vmem>>, vector<1x512xf32>
    tpu.vector_store %arg7[%c1, %c0_6], %8 {strides = array<i32>} : memref<64x512xf32, #tpu.memory_space<vmem>>, vector<1x512xf32>,
    %c1_7 = arith.constant 1 : index
    %10 = memref.load %arg1[%c1_7] : memref<16xi32, #tpu.memory_space<smem>>
    %11 = arith.index_cast %10 : i32 to index
    %c0_8 = arith.constant 0 : index
    %12 = vector.load %arg2[%11, %c0_8] : memref<16x512xf32, #tpu.memory_space<vmem>>, vector<1x512xf32>
    %c8_9 = arith.constant 8 : index
    %c0_10 = arith.constant 0 : index
    %13 = vector.load %arg7[%c8_9, %c0_10] : memref<64x512xf32, #tpu.memory_space<vmem>>, vector<1x512xf32>
    tpu.vector_store %arg7[%c8_9, %c0_10], %12 {strides = array<i32>} : memref<64x512xf32, #tpu.memory_space<vmem>>, vector<1x512xf32>,
    %c9 = arith.constant 9 : index
    %14 = memref.load %arg1[%c9] : memref<16xi32, #tpu.memory_space<smem>>
    %15 = arith.index_cast %14 : i32 to index
    %c0_11 = arith.constant 0 : index
    %16 = vector.load %arg2[%15, %c0_11] : memref<16x512xf32, #tpu.memory_space<vmem>>, vector<1x512xf32>
    %c9_12 = arith.constant 9 : index
    %c0_13 = arith.constant 0 : index
    %17 = vector.load %arg7[%c9_12, %c0_13] : memref<64x512xf32, #tpu.memory_space<vmem>>, vector<1x512xf32>
    tpu.vector_store %arg7[%c9_12, %c0_13], %16 {strides = array<i32>} : memref<64x512xf32, #tpu.memory_space<vmem>>, vector<1x512xf32>,
    %c2 = arith.constant 2 : index
    %18 = memref.load %arg1[%c2] : memref<16xi32, #tpu.memory_space<smem>>
    %19 = arith.index_cast %18 : i32 to index
    %c0_14 = arith.constant 0 : index
    %20 = vector.load %arg2[%19, %c0_14] : memref<16x512xf32, #tpu.memory_space<vmem>>, vector<1x512xf32>
    %c16 = arith.constant 16 : index
    %c0_15 = arith.constant 0 : index
    %21 = vector.load %arg7[%c16, %c0_15] : memref<64x512xf32, #tpu.memory_space<vmem>>, vector<1x512xf32>
    tpu.vector_store %arg7[%c16, %c0_15], %20 {strides = array<i32>} : memref<64x512xf32, #tpu.memory_space<vmem>>, vector<1x512xf32>,
    %c10 = arith.constant 10 : index
    %22 = memref.load %arg1[%c10] : memref<16xi32, #tpu.memory_space<smem>>
    %23 = arith.index_cast %22 : i32 to index
    %c0_16 = arith.constant 0 : index
    %24 = vector.load %arg2[%23, %c0_16] : memref<16x512xf32, #tpu.memory_space<vmem>>, vector<1x512xf32>
    %c17 = arith.constant 17 : index
    %c0_17 = arith.constant 0 : index
    %25 = vector.load %arg7[%c17, %c0_17] : memref<64x512xf32, #tpu.memory_space<vmem>>, vector<1x512xf32>
    tpu.vector_store %arg7[%c17, %c0_17], %24 {strides = array<i32>} : memref<64x512xf32, #tpu.memory_space<vmem>>, vector<1x512xf32>,
    %c3 = arith.constant 3 : index
    %26 = memref.load %arg1[%c3] : memref<16xi32, #tpu.memory_space<smem>>
    %27 = arith.index_cast %26 : i32 to index
    %c0_18 = arith.constant 0 : index
    %28 = vector.load %arg2[%27, %c0_18] : memref<16x512xf32, #tpu.memory_space<vmem>>, vector<1x512xf32>
    %c24 = arith.constant 24 : index
    %c0_19 = arith.constant 0 : index
    %29 = vector.load %arg7[%c24, %c0_19] : memref<64x512xf32, #tpu.memory_space<vmem>>, vector<1x512xf32>
    tpu.vector_store %arg7[%c24, %c0_19], %28 {strides = array<i32>} : memref<64x512xf32, #tpu.memory_space<vmem>>, vector<1x512xf32>,
    %c11 = arith.constant 11 : index
    %30 = memref.load %arg1[%c11] : memref<16xi32, #tpu.memory_space<smem>>
    %31 = arith.index_cast %30 : i32 to index
    %c0_20 = arith.constant 0 : index
    %32 = vector.load %arg2[%31, %c0_20] : memref<16x512xf32, #tpu.memory_space<vmem>>, vector<1x512xf32>
    %c25 = arith.constant 25 : index
    %c0_21 = arith.constant 0 : index
    %33 = vector.load %arg7[%c25, %c0_21] : memref<64x512xf32, #tpu.memory_space<vmem>>, vector<1x512xf32>
    tpu.vector_store %arg7[%c25, %c0_21], %32 {strides = array<i32>} : memref<64x512xf32, #tpu.memory_space<vmem>>, vector<1x512xf32>,
    %c4 = arith.constant 4 : index
    %34 = memref.load %arg1[%c4] : memref<16xi32, #tpu.memory_space<smem>>
    %35 = arith.index_cast %34 : i32 to index
    %c0_22 = arith.constant 0 : index
    %36 = vector.load %arg2[%35, %c0_22] : memref<16x512xf32, #tpu.memory_space<vmem>>, vector<1x512xf32>
    %c32 = arith.constant 32 : index
    %c0_23 = arith.constant 0 : index
    %37 = vector.load %arg7[%c32, %c0_23] : memref<64x512xf32, #tpu.memory_space<vmem>>, vector<1x512xf32>
    tpu.vector_store %arg7[%c32, %c0_23], %36 {strides = array<i32>} : memref<64x512xf32, #tpu.memory_space<vmem>>, vector<1x512xf32>,
    %c12 = arith.constant 12 : index
    %38 = memref.load %arg1[%c12] : memref<16xi32, #tpu.memory_space<smem>>
    %39 = arith.index_cast %38 : i32 to index
    %c0_24 = arith.constant 0 : index
    %40 = vector.load %arg2[%39, %c0_24] : memref<16x512xf32, #tpu.memory_space<vmem>>, vector<1x512xf32>
    %c33 = arith.constant 33 : index
    %c0_25 = arith.constant 0 : index
    %41 = vector.load %arg7[%c33, %c0_25] : memref<64x512xf32, #tpu.memory_space<vmem>>, vector<1x512xf32>
    tpu.vector_store %arg7[%c33, %c0_25], %40 {strides = array<i32>} : memref<64x512xf32, #tpu.memory_space<vmem>>, vector<1x512xf32>,
    %c5 = arith.constant 5 : index
    %42 = memref.load %arg1[%c5] : memref<16xi32, #tpu.memory_space<smem>>
    %43 = arith.index_cast %42 : i32 to index
    %c0_26 = arith.constant 0 : index
    %44 = vector.load %arg2[%43, %c0_26] : memref<16x512xf32, #tpu.memory_space<vmem>>, vector<1x512xf32>
    %c40 = arith.constant 40 : index
    %c0_27 = arith.constant 0 : index
    %45 = vector.load %arg7[%c40, %c0_27] : memref<64x512xf32, #tpu.memory_space<vmem>>, vector<1x512xf32>
    tpu.vector_store %arg7[%c40, %c0_27], %44 {strides = array<i32>} : memref<64x512xf32, #tpu.memory_space<vmem>>, vector<1x512xf32>,
    %c13 = arith.constant 13 : index
    %46 = memref.load %arg1[%c13] : memref<16xi32, #tpu.memory_space<smem>>
    %47 = arith.index_cast %46 : i32 to index
    %c0_28 = arith.constant 0 : index
    %48 = vector.load %arg2[%47, %c0_28] : memref<16x512xf32, #tpu.memory_space<vmem>>, vector<1x512xf32>
    %c41 = arith.constant 41 : index
    %c0_29 = arith.constant 0 : index
    %49 = vector.load %arg7[%c41, %c0_29] : memref<64x512xf32, #tpu.memory_space<vmem>>, vector<1x512xf32>
    tpu.vector_store %arg7[%c41, %c0_29], %48 {strides = array<i32>} : memref<64x512xf32, #tpu.memory_space<vmem>>, vector<1x512xf32>,
    %c6 = arith.constant 6 : index
    %50 = memref.load %arg1[%c6] : memref<16xi32, #tpu.memory_space<smem>>
    %51 = arith.index_cast %50 : i32 to index
    %c0_30 = arith.constant 0 : index
    %52 = vector.load %arg2[%51, %c0_30] : memref<16x512xf32, #tpu.memory_space<vmem>>, vector<1x512xf32>
    %c48 = arith.constant 48 : index
    %c0_31 = arith.constant 0 : index
    %53 = vector.load %arg7[%c48, %c0_31] : memref<64x512xf32, #tpu.memory_space<vmem>>, vector<1x512xf32>
    tpu.vector_store %arg7[%c48, %c0_31], %52 {strides = array<i32>} : memref<64x512xf32, #tpu.memory_space<vmem>>, vector<1x512xf32>,
    %c14 = arith.constant 14 : index
    %54 = memref.load %arg1[%c14] : memref<16xi32, #tpu.memory_space<smem>>
    %55 = arith.index_cast %54 : i32 to index
    %c0_32 = arith.constant 0 : index
    %56 = vector.load %arg2[%55, %c0_32] : memref<16x512xf32, #tpu.memory_space<vmem>>, vector<1x512xf32>
    %c49 = arith.constant 49 : index
    %c0_33 = arith.constant 0 : index
    %57 = vector.load %arg7[%c49, %c0_33] : memref<64x512xf32, #tpu.memory_space<vmem>>, vector<1x512xf32>
    tpu.vector_store %arg7[%c49, %c0_33], %56 {strides = array<i32>} : memref<64x512xf32, #tpu.memory_space<vmem>>, vector<1x512xf32>,
    %c7 = arith.constant 7 : index
    %58 = memref.load %arg1[%c7] : memref<16xi32, #tpu.memory_space<smem>>
    %59 = arith.index_cast %58 : i32 to index
    %c0_34 = arith.constant 0 : index
    %60 = vector.load %arg2[%59, %c0_34] : memref<16x512xf32, #tpu.memory_space<vmem>>, vector<1x512xf32>
    %c56 = arith.constant 56 : index
    %c0_35 = arith.constant 0 : index
    %61 = vector.load %arg7[%c56, %c0_35] : memref<64x512xf32, #tpu.memory_space<vmem>>, vector<1x512xf32>
    tpu.vector_store %arg7[%c56, %c0_35], %60 {strides = array<i32>} : memref<64x512xf32, #tpu.memory_space<vmem>>, vector<1x512xf32>,
    %c15 = arith.constant 15 : index
    %62 = memref.load %arg1[%c15] : memref<16xi32, #tpu.memory_space<smem>>
    %63 = arith.index_cast %62 : i32 to index
    %c0_36 = arith.constant 0 : index
    %64 = vector.load %arg2[%63, %c0_36] : memref<16x512xf32, #tpu.memory_space<vmem>>, vector<1x512xf32>
    %c57 = arith.constant 57 : index
    %c0_37 = arith.constant 0 : index
    %65 = vector.load %arg7[%c57, %c0_37] : memref<64x512xf32, #tpu.memory_space<vmem>>, vector<1x512xf32>
    tpu.vector_store %arg7[%c57, %c0_37], %64 {strides = array<i32>} : memref<64x512xf32, #tpu.memory_space<vmem>>, vector<1x512xf32>,
    %cst_38 = arith.constant 0.000000e+00 : f32
    %66 = vector.broadcast %cst_38 : f32 to vector<8x128xf32>
    %cst_39 = arith.constant 0.000000e+00 : f32
    %67 = vector.broadcast %cst_39 : f32 to vector<8x128xf32>
    %c0_40 = arith.constant 0 : index
    %c0_41 = arith.constant 0 : index
    %68 = vector.load %arg7[%c0_40, %c0_41] : memref<64x512xf32, #tpu.memory_space<vmem>>, vector<8x512xf32>
    %69 = arith.truncf %66 : vector<8x128xf32> to vector<8x128xbf16>
    %c0_42 = arith.constant 0 : index
    %c0_43 = arith.constant 0 : index
    %70 = vector.load %arg3[%c0_42, %c0_43] : memref<128x512xbf16, #tpu.memory_space<vmem>>, vector<128x512xbf16>
    %cst_44 = arith.constant dense<0.000000e+00> : vector<8x512xf32>
    %71 = tpu.matmul %69, %70, %cst_44 {dimension_numbers = #tpu.dot_dimension_numbers<[1], [0], [0], [1], [0, 0, 1, 1], [], []>} : vector<8x128xbf16>, vector<128x512xbf16>, vector<8x512xf32> -> vector<8x512xf32>
    %72 = arith.addf %68, %71 : vector<8x512xf32>
    %73 = vector.extract_strided_slice %72 {offsets = [0, 0], sizes = [8, 128], strides = [1, 1]} : vector<8x512xf32> to vector<8x128xf32>
    %cst_45 = arith.constant 5.000000e-01 : f32
    %74 = vector.broadcast %cst_45 : f32 to vector<8x128xf32>
    %75 = arith.mulf %74, %73 : vector<8x128xf32>
    %76 = math.tanh %75 : vector<8x128xf32>
    %cst_46 = arith.constant 5.000000e-01 : f32
    %77 = vector.broadcast %cst_46 : f32 to vector<8x128xf32>
    %78 = arith.mulf %77, %76 : vector<8x128xf32>
    %cst_47 = arith.constant 5.000000e-01 : f32
    %79 = vector.broadcast %cst_47 : f32 to vector<8x128xf32>
    %80 = arith.addf %78, %79 : vector<8x128xf32>
    %81 = vector.extract_strided_slice %72 {offsets = [0, 128], sizes = [8, 128], strides = [1, 1]} : vector<8x512xf32> to vector<8x128xf32>
    %cst_48 = arith.constant 5.000000e-01 : f32
    %82 = vector.broadcast %cst_48 : f32 to vector<8x128xf32>
    %83 = arith.mulf %82, %81 : vector<8x128xf32>
    %84 = math.tanh %83 : vector<8x128xf32>
    %cst_49 = arith.constant 5.000000e-01 : f32
    %85 = vector.broadcast %cst_49 : f32 to vector<8x128xf32>
    %86 = arith.mulf %85, %84 : vector<8x128xf32>
    %cst_50 = arith.constant 5.000000e-01 : f32
    %87 = vector.broadcast %cst_50 : f32 to vector<8x128xf32>
    %88 = arith.addf %86, %87 : vector<8x128xf32>
    %89 = vector.extract_strided_slice %72 {offsets = [0, 256], sizes = [8, 128], strides = [1, 1]} : vector<8x512xf32> to vector<8x128xf32>
    %90 = math.tanh %89 : vector<8x128xf32>
    %91 = vector.extract_strided_slice %72 {offsets = [0, 384], sizes = [8, 128], strides = [1, 1]} : vector<8x512xf32> to vector<8x128xf32>
    %cst_51 = arith.constant 5.000000e-01 : f32
    %92 = vector.broadcast %cst_51 : f32 to vector<8x128xf32>
    %93 = arith.mulf %92, %91 : vector<8x128xf32>
    %94 = math.tanh %93 : vector<8x128xf32>
    %cst_52 = arith.constant 5.000000e-01 : f32
    %95 = vector.broadcast %cst_52 : f32 to vector<8x128xf32>
    %96 = arith.mulf %95, %94 : vector<8x128xf32>
    %cst_53 = arith.constant 5.000000e-01 : f32
    %97 = vector.broadcast %cst_53 : f32 to vector<8x128xf32>
    %98 = arith.addf %96, %97 : vector<8x128xf32>
    %99 = arith.mulf %88, %67 : vector<8x128xf32>
    %100 = arith.mulf %80, %90 : vector<8x128xf32>
    %101 = arith.addf %99, %100 : vector<8x128xf32>
    %102 = math.tanh %101 : vector<8x128xf32>
    %103 = arith.mulf %98, %102 : vector<8x128xf32>
    %c8_54 = arith.constant 8 : index
    %c0_55 = arith.constant 0 : index
    %104 = vector.load %arg7[%c8_54, %c0_55] : memref<64x512xf32, #tpu.memory_space<vmem>>, vector<8x512xf32>
    %105 = arith.truncf %103 : vector<8x128xf32> to vector<8x128xbf16>
    %c0_56 = arith.constant 0 : index
    %c0_57 = arith.constant 0 : index
    %106 = vector.load %arg3[%c0_56, %c0_57] : memref<128x512xbf16, #tpu.memory_space<vmem>>, vector<128x512xbf16>
    %cst_58 = arith.constant dense<0.000000e+00> : vector<8x512xf32>
    %107 = tpu.matmul %105, %106, %cst_58 {dimension_numbers = #tpu.dot_dimension_numbers<[1], [0], [0], [1], [0, 0, 1, 1], [], []>} : vector<8x128xbf16>, vector<128x512xbf16>, vector<8x512xf32> -> vector<8x512xf32>
    %108 = arith.addf %104, %107 : vector<8x512xf32>
    %109 = vector.extract_strided_slice %108 {offsets = [0, 0], sizes = [8, 128], strides = [1, 1]} : vector<8x512xf32> to vector<8x128xf32>
    %cst_59 = arith.constant 5.000000e-01 : f32
    %110 = vector.broadcast %cst_59 : f32 to vector<8x128xf32>
    %111 = arith.mulf %110, %109 : vector<8x128xf32>
    %112 = math.tanh %111 : vector<8x128xf32>
    %cst_60 = arith.constant 5.000000e-01 : f32
    %113 = vector.broadcast %cst_60 : f32 to vector<8x128xf32>
    %114 = arith.mulf %113, %112 : vector<8x128xf32>
    %cst_61 = arith.constant 5.000000e-01 : f32
    %115 = vector.broadcast %cst_61 : f32 to vector<8x128xf32>
    %116 = arith.addf %114, %115 : vector<8x128xf32>
    %117 = vector.extract_strided_slice %108 {offsets = [0, 128], sizes = [8, 128], strides = [1, 1]} : vector<8x512xf32> to vector<8x128xf32>
    %cst_62 = arith.constant 5.000000e-01 : f32
    %118 = vector.broadcast %cst_62 : f32 to vector<8x128xf32>
    %119 = arith.mulf %118, %117 : vector<8x128xf32>
    %120 = math.tanh %119 : vector<8x128xf32>
    %cst_63 = arith.constant 5.000000e-01 : f32
    %121 = vector.broadcast %cst_63 : f32 to vector<8x128xf32>
    %122 = arith.mulf %121, %120 : vector<8x128xf32>
    %cst_64 = arith.constant 5.000000e-01 : f32
    %123 = vector.broadcast %cst_64 : f32 to vector<8x128xf32>
    %124 = arith.addf %122, %123 : vector<8x128xf32>
    %125 = vector.extract_strided_slice %108 {offsets = [0, 256], sizes = [8, 128], strides = [1, 1]} : vector<8x512xf32> to vector<8x128xf32>
    %126 = math.tanh %125 : vector<8x128xf32>
    %127 = vector.extract_strided_slice %108 {offsets = [0, 384], sizes = [8, 128], strides = [1, 1]} : vector<8x512xf32> to vector<8x128xf32>
    %cst_65 = arith.constant 5.000000e-01 : f32
    %128 = vector.broadcast %cst_65 : f32 to vector<8x128xf32>
    %129 = arith.mulf %128, %127 : vector<8x128xf32>
    %130 = math.tanh %129 : vector<8x128xf32>
    %cst_66 = arith.constant 5.000000e-01 : f32
    %131 = vector.broadcast %cst_66 : f32 to vector<8x128xf32>
    %132 = arith.mulf %131, %130 : vector<8x128xf32>
    %cst_67 = arith.constant 5.000000e-01 : f32
    %133 = vector.broadcast %cst_67 : f32 to vector<8x128xf32>
    %134 = arith.addf %132, %133 : vector<8x128xf32>
    %135 = arith.mulf %124, %101 : vector<8x128xf32>
    %136 = arith.mulf %116, %126 : vector<8x128xf32>
    %137 = arith.addf %135, %136 : vector<8x128xf32>
    %138 = math.tanh %137 : vector<8x128xf32>
    %139 = arith.mulf %134, %138 : vector<8x128xf32>
    %c16_68 = arith.constant 16 : index
    %c0_69 = arith.constant 0 : index
    %140 = vector.load %arg7[%c16_68, %c0_69] : memref<64x512xf32, #tpu.memory_space<vmem>>, vector<8x512xf32>
    %141 = arith.truncf %139 : vector<8x128xf32> to vector<8x128xbf16>
    %c0_70 = arith.constant 0 : index
    %c0_71 = arith.constant 0 : index
    %142 = vector.load %arg3[%c0_70, %c0_71] : memref<128x512xbf16, #tpu.memory_space<vmem>>, vector<128x512xbf16>
    %cst_72 = arith.constant dense<0.000000e+00> : vector<8x512xf32>
    %143 = tpu.matmul %141, %142, %cst_72 {dimension_numbers = #tpu.dot_dimension_numbers<[1], [0], [0], [1], [0, 0, 1, 1], [], []>} : vector<8x128xbf16>, vector<128x512xbf16>, vector<8x512xf32> -> vector<8x512xf32>
    %144 = arith.addf %140, %143 : vector<8x512xf32>
    %145 = vector.extract_strided_slice %144 {offsets = [0, 0], sizes = [8, 128], strides = [1, 1]} : vector<8x512xf32> to vector<8x128xf32>
    %cst_73 = arith.constant 5.000000e-01 : f32
    %146 = vector.broadcast %cst_73 : f32 to vector<8x128xf32>
    %147 = arith.mulf %146, %145 : vector<8x128xf32>
    %148 = math.tanh %147 : vector<8x128xf32>
    %cst_74 = arith.constant 5.000000e-01 : f32
    %149 = vector.broadcast %cst_74 : f32 to vector<8x128xf32>
    %150 = arith.mulf %149, %148 : vector<8x128xf32>
    %cst_75 = arith.constant 5.000000e-01 : f32
    %151 = vector.broadcast %cst_75 : f32 to vector<8x128xf32>
    %152 = arith.addf %150, %151 : vector<8x128xf32>
    %153 = vector.extract_strided_slice %144 {offsets = [0, 128], sizes = [8, 128], strides = [1, 1]} : vector<8x512xf32> to vector<8x128xf32>
    %cst_76 = arith.constant 5.000000e-01 : f32
    %154 = vector.broadcast %cst_76 : f32 to vector<8x128xf32>
    %155 = arith.mulf %154, %153 : vector<8x128xf32>
    %156 = math.tanh %155 : vector<8x128xf32>
    %cst_77 = arith.constant 5.000000e-01 : f32
    %157 = vector.broadcast %cst_77 : f32 to vector<8x128xf32>
    %158 = arith.mulf %157, %156 : vector<8x128xf32>
    %cst_78 = arith.constant 5.000000e-01 : f32
    %159 = vector.broadcast %cst_78 : f32 to vector<8x128xf32>
    %160 = arith.addf %158, %159 : vector<8x128xf32>
    %161 = vector.extract_strided_slice %144 {offsets = [0, 256], sizes = [8, 128], strides = [1, 1]} : vector<8x512xf32> to vector<8x128xf32>
    %162 = math.tanh %161 : vector<8x128xf32>
    %163 = vector.extract_strided_slice %144 {offsets = [0, 384], sizes = [8, 128], strides = [1, 1]} : vector<8x512xf32> to vector<8x128xf32>
    %cst_79 = arith.constant 5.000000e-01 : f32
    %164 = vector.broadcast %cst_79 : f32 to vector<8x128xf32>
    %165 = arith.mulf %164, %163 : vector<8x128xf32>
    %166 = math.tanh %165 : vector<8x128xf32>
    %cst_80 = arith.constant 5.000000e-01 : f32
    %167 = vector.broadcast %cst_80 : f32 to vector<8x128xf32>
    %168 = arith.mulf %167, %166 : vector<8x128xf32>
    %cst_81 = arith.constant 5.000000e-01 : f32
    %169 = vector.broadcast %cst_81 : f32 to vector<8x128xf32>
    %170 = arith.addf %168, %169 : vector<8x128xf32>
    %171 = arith.mulf %160, %137 : vector<8x128xf32>
    %172 = arith.mulf %152, %162 : vector<8x128xf32>
    %173 = arith.addf %171, %172 : vector<8x128xf32>
    %174 = math.tanh %173 : vector<8x128xf32>
    %175 = arith.mulf %170, %174 : vector<8x128xf32>
    %c24_82 = arith.constant 24 : index
    %c0_83 = arith.constant 0 : index
    %176 = vector.load %arg7[%c24_82, %c0_83] : memref<64x512xf32, #tpu.memory_space<vmem>>, vector<8x512xf32>
    %177 = arith.truncf %175 : vector<8x128xf32> to vector<8x128xbf16>
    %c0_84 = arith.constant 0 : index
    %c0_85 = arith.constant 0 : index
    %178 = vector.load %arg3[%c0_84, %c0_85] : memref<128x512xbf16, #tpu.memory_space<vmem>>, vector<128x512xbf16>
    %cst_86 = arith.constant dense<0.000000e+00> : vector<8x512xf32>
    %179 = tpu.matmul %177, %178, %cst_86 {dimension_numbers = #tpu.dot_dimension_numbers<[1], [0], [0], [1], [0, 0, 1, 1], [], []>} : vector<8x128xbf16>, vector<128x512xbf16>, vector<8x512xf32> -> vector<8x512xf32>
    %180 = arith.addf %176, %179 : vector<8x512xf32>
    %181 = vector.extract_strided_slice %180 {offsets = [0, 0], sizes = [8, 128], strides = [1, 1]} : vector<8x512xf32> to vector<8x128xf32>
    %cst_87 = arith.constant 5.000000e-01 : f32
    %182 = vector.broadcast %cst_87 : f32 to vector<8x128xf32>
    %183 = arith.mulf %182, %181 : vector<8x128xf32>
    %184 = math.tanh %183 : vector<8x128xf32>
    %cst_88 = arith.constant 5.000000e-01 : f32
    %185 = vector.broadcast %cst_88 : f32 to vector<8x128xf32>
    %186 = arith.mulf %185, %184 : vector<8x128xf32>
    %cst_89 = arith.constant 5.000000e-01 : f32
    %187 = vector.broadcast %cst_89 : f32 to vector<8x128xf32>
    %188 = arith.addf %186, %187 : vector<8x128xf32>
    %189 = vector.extract_strided_slice %180 {offsets = [0, 128], sizes = [8, 128], strides = [1, 1]} : vector<8x512xf32> to vector<8x128xf32>
    %cst_90 = arith.constant 5.000000e-01 : f32
    %190 = vector.broadcast %cst_90 : f32 to vector<8x128xf32>
    %191 = arith.mulf %190, %189 : vector<8x128xf32>
    %192 = math.tanh %191 : vector<8x128xf32>
    %cst_91 = arith.constant 5.000000e-01 : f32
    %193 = vector.broadcast %cst_91 : f32 to vector<8x128xf32>
    %194 = arith.mulf %193, %192 : vector<8x128xf32>
    %cst_92 = arith.constant 5.000000e-01 : f32
    %195 = vector.broadcast %cst_92 : f32 to vector<8x128xf32>
    %196 = arith.addf %194, %195 : vector<8x128xf32>
    %197 = vector.extract_strided_slice %180 {offsets = [0, 256], sizes = [8, 128], strides = [1, 1]} : vector<8x512xf32> to vector<8x128xf32>
    %198 = math.tanh %197 : vector<8x128xf32>
    %199 = vector.extract_strided_slice %180 {offsets = [0, 384], sizes = [8, 128], strides = [1, 1]} : vector<8x512xf32> to vector<8x128xf32>
    %cst_93 = arith.constant 5.000000e-01 : f32
    %200 = vector.broadcast %cst_93 : f32 to vector<8x128xf32>
    %201 = arith.mulf %200, %199 : vector<8x128xf32>
    %202 = math.tanh %201 : vector<8x128xf32>
    %cst_94 = arith.constant 5.000000e-01 : f32
    %203 = vector.broadcast %cst_94 : f32 to vector<8x128xf32>
    %204 = arith.mulf %203, %202 : vector<8x128xf32>
    %cst_95 = arith.constant 5.000000e-01 : f32
    %205 = vector.broadcast %cst_95 : f32 to vector<8x128xf32>
    %206 = arith.addf %204, %205 : vector<8x128xf32>
    %207 = arith.mulf %196, %173 : vector<8x128xf32>
    %208 = arith.mulf %188, %198 : vector<8x128xf32>
    %209 = arith.addf %207, %208 : vector<8x128xf32>
    %210 = math.tanh %209 : vector<8x128xf32>
    %211 = arith.mulf %206, %210 : vector<8x128xf32>
    %c32_96 = arith.constant 32 : index
    %c0_97 = arith.constant 0 : index
    %212 = vector.load %arg7[%c32_96, %c0_97] : memref<64x512xf32, #tpu.memory_space<vmem>>, vector<8x512xf32>
    %213 = arith.truncf %211 : vector<8x128xf32> to vector<8x128xbf16>
    %c0_98 = arith.constant 0 : index
    %c0_99 = arith.constant 0 : index
    %214 = vector.load %arg3[%c0_98, %c0_99] : memref<128x512xbf16, #tpu.memory_space<vmem>>, vector<128x512xbf16>
    %cst_100 = arith.constant dense<0.000000e+00> : vector<8x512xf32>
    %215 = tpu.matmul %213, %214, %cst_100 {dimension_numbers = #tpu.dot_dimension_numbers<[1], [0], [0], [1], [0, 0, 1, 1], [], []>} : vector<8x128xbf16>, vector<128x512xbf16>, vector<8x512xf32> -> vector<8x512xf32>
    %216 = arith.addf %212, %215 : vector<8x512xf32>
    %217 = vector.extract_strided_slice %216 {offsets = [0, 0], sizes = [8, 128], strides = [1, 1]} : vector<8x512xf32> to vector<8x128xf32>
    %cst_101 = arith.constant 5.000000e-01 : f32
    %218 = vector.broadcast %cst_101 : f32 to vector<8x128xf32>
    %219 = arith.mulf %218, %217 : vector<8x128xf32>
    %220 = math.tanh %219 : vector<8x128xf32>
    %cst_102 = arith.constant 5.000000e-01 : f32
    %221 = vector.broadcast %cst_102 : f32 to vector<8x128xf32>
    %222 = arith.mulf %221, %220 : vector<8x128xf32>
    %cst_103 = arith.constant 5.000000e-01 : f32
    %223 = vector.broadcast %cst_103 : f32 to vector<8x128xf32>
    %224 = arith.addf %222, %223 : vector<8x128xf32>
    %225 = vector.extract_strided_slice %216 {offsets = [0, 128], sizes = [8, 128], strides = [1, 1]} : vector<8x512xf32> to vector<8x128xf32>
    %cst_104 = arith.constant 5.000000e-01 : f32
    %226 = vector.broadcast %cst_104 : f32 to vector<8x128xf32>
    %227 = arith.mulf %226, %225 : vector<8x128xf32>
    %228 = math.tanh %227 : vector<8x128xf32>
    %cst_105 = arith.constant 5.000000e-01 : f32
    %229 = vector.broadcast %cst_105 : f32 to vector<8x128xf32>
    %230 = arith.mulf %229, %228 : vector<8x128xf32>
    %cst_106 = arith.constant 5.000000e-01 : f32
    %231 = vector.broadcast %cst_106 : f32 to vector<8x128xf32>
    %232 = arith.addf %230, %231 : vector<8x128xf32>
    %233 = vector.extract_strided_slice %216 {offsets = [0, 256], sizes = [8, 128], strides = [1, 1]} : vector<8x512xf32> to vector<8x128xf32>
    %234 = math.tanh %233 : vector<8x128xf32>
    %235 = vector.extract_strided_slice %216 {offsets = [0, 384], sizes = [8, 128], strides = [1, 1]} : vector<8x512xf32> to vector<8x128xf32>
    %cst_107 = arith.constant 5.000000e-01 : f32
    %236 = vector.broadcast %cst_107 : f32 to vector<8x128xf32>
    %237 = arith.mulf %236, %235 : vector<8x128xf32>
    %238 = math.tanh %237 : vector<8x128xf32>
    %cst_108 = arith.constant 5.000000e-01 : f32
    %239 = vector.broadcast %cst_108 : f32 to vector<8x128xf32>
    %240 = arith.mulf %239, %238 : vector<8x128xf32>
    %cst_109 = arith.constant 5.000000e-01 : f32
    %241 = vector.broadcast %cst_109 : f32 to vector<8x128xf32>
    %242 = arith.addf %240, %241 : vector<8x128xf32>
    %243 = arith.mulf %232, %209 : vector<8x128xf32>
    %244 = arith.mulf %224, %234 : vector<8x128xf32>
    %245 = arith.addf %243, %244 : vector<8x128xf32>
    %246 = math.tanh %245 : vector<8x128xf32>
    %247 = arith.mulf %242, %246 : vector<8x128xf32>
    %c40_110 = arith.constant 40 : index
    %c0_111 = arith.constant 0 : index
    %248 = vector.load %arg7[%c40_110, %c0_111] : memref<64x512xf32, #tpu.memory_space<vmem>>, vector<8x512xf32>
    %249 = arith.truncf %247 : vector<8x128xf32> to vector<8x128xbf16>
    %c0_112 = arith.constant 0 : index
    %c0_113 = arith.constant 0 : index
    %250 = vector.load %arg3[%c0_112, %c0_113] : memref<128x512xbf16, #tpu.memory_space<vmem>>, vector<128x512xbf16>
    %cst_114 = arith.constant dense<0.000000e+00> : vector<8x512xf32>
    %251 = tpu.matmul %249, %250, %cst_114 {dimension_numbers = #tpu.dot_dimension_numbers<[1], [0], [0], [1], [0, 0, 1, 1], [], []>} : vector<8x128xbf16>, vector<128x512xbf16>, vector<8x512xf32> -> vector<8x512xf32>
    %252 = arith.addf %248, %251 : vector<8x512xf32>
    %253 = vector.extract_strided_slice %252 {offsets = [0, 0], sizes = [8, 128], strides = [1, 1]} : vector<8x512xf32> to vector<8x128xf32>
    %cst_115 = arith.constant 5.000000e-01 : f32
    %254 = vector.broadcast %cst_115 : f32 to vector<8x128xf32>
    %255 = arith.mulf %254, %253 : vector<8x128xf32>
    %256 = math.tanh %255 : vector<8x128xf32>
    %cst_116 = arith.constant 5.000000e-01 : f32
    %257 = vector.broadcast %cst_116 : f32 to vector<8x128xf32>
    %258 = arith.mulf %257, %256 : vector<8x128xf32>
    %cst_117 = arith.constant 5.000000e-01 : f32
    %259 = vector.broadcast %cst_117 : f32 to vector<8x128xf32>
    %260 = arith.addf %258, %259 : vector<8x128xf32>
    %261 = vector.extract_strided_slice %252 {offsets = [0, 128], sizes = [8, 128], strides = [1, 1]} : vector<8x512xf32> to vector<8x128xf32>
    %cst_118 = arith.constant 5.000000e-01 : f32
    %262 = vector.broadcast %cst_118 : f32 to vector<8x128xf32>
    %263 = arith.mulf %262, %261 : vector<8x128xf32>
    %264 = math.tanh %263 : vector<8x128xf32>
    %cst_119 = arith.constant 5.000000e-01 : f32
    %265 = vector.broadcast %cst_119 : f32 to vector<8x128xf32>
    %266 = arith.mulf %265, %264 : vector<8x128xf32>
    %cst_120 = arith.constant 5.000000e-01 : f32
    %267 = vector.broadcast %cst_120 : f32 to vector<8x128xf32>
    %268 = arith.addf %266, %267 : vector<8x128xf32>
    %269 = vector.extract_strided_slice %252 {offsets = [0, 256], sizes = [8, 128], strides = [1, 1]} : vector<8x512xf32> to vector<8x128xf32>
    %270 = math.tanh %269 : vector<8x128xf32>
    %271 = vector.extract_strided_slice %252 {offsets = [0, 384], sizes = [8, 128], strides = [1, 1]} : vector<8x512xf32> to vector<8x128xf32>
    %cst_121 = arith.constant 5.000000e-01 : f32
    %272 = vector.broadcast %cst_121 : f32 to vector<8x128xf32>
    %273 = arith.mulf %272, %271 : vector<8x128xf32>
    %274 = math.tanh %273 : vector<8x128xf32>
    %cst_122 = arith.constant 5.000000e-01 : f32
    %275 = vector.broadcast %cst_122 : f32 to vector<8x128xf32>
    %276 = arith.mulf %275, %274 : vector<8x128xf32>
    %cst_123 = arith.constant 5.000000e-01 : f32
    %277 = vector.broadcast %cst_123 : f32 to vector<8x128xf32>
    %278 = arith.addf %276, %277 : vector<8x128xf32>
    %279 = arith.mulf %268, %245 : vector<8x128xf32>
    %280 = arith.mulf %260, %270 : vector<8x128xf32>
    %281 = arith.addf %279, %280 : vector<8x128xf32>
    %282 = math.tanh %281 : vector<8x128xf32>
    %283 = arith.mulf %278, %282 : vector<8x128xf32>
    %c48_124 = arith.constant 48 : index
    %c0_125 = arith.constant 0 : index
    %284 = vector.load %arg7[%c48_124, %c0_125] : memref<64x512xf32, #tpu.memory_space<vmem>>, vector<8x512xf32>
    %285 = arith.truncf %283 : vector<8x128xf32> to vector<8x128xbf16>
    %c0_126 = arith.constant 0 : index
    %c0_127 = arith.constant 0 : index
    %286 = vector.load %arg3[%c0_126, %c0_127] : memref<128x512xbf16, #tpu.memory_space<vmem>>, vector<128x512xbf16>
    %cst_128 = arith.constant dense<0.000000e+00> : vector<8x512xf32>
    %287 = tpu.matmul %285, %286, %cst_128 {dimension_numbers = #tpu.dot_dimension_numbers<[1], [0], [0], [1], [0, 0, 1, 1], [], []>} : vector<8x128xbf16>, vector<128x512xbf16>, vector<8x512xf32> -> vector<8x512xf32>
    %288 = arith.addf %284, %287 : vector<8x512xf32>
    %289 = vector.extract_strided_slice %288 {offsets = [0, 0], sizes = [8, 128], strides = [1, 1]} : vector<8x512xf32> to vector<8x128xf32>
    %cst_129 = arith.constant 5.000000e-01 : f32
    %290 = vector.broadcast %cst_129 : f32 to vector<8x128xf32>
    %291 = arith.mulf %290, %289 : vector<8x128xf32>
    %292 = math.tanh %291 : vector<8x128xf32>
    %cst_130 = arith.constant 5.000000e-01 : f32
    %293 = vector.broadcast %cst_130 : f32 to vector<8x128xf32>
    %294 = arith.mulf %293, %292 : vector<8x128xf32>
    %cst_131 = arith.constant 5.000000e-01 : f32
    %295 = vector.broadcast %cst_131 : f32 to vector<8x128xf32>
    %296 = arith.addf %294, %295 : vector<8x128xf32>
    %297 = vector.extract_strided_slice %288 {offsets = [0, 128], sizes = [8, 128], strides = [1, 1]} : vector<8x512xf32> to vector<8x128xf32>
    %cst_132 = arith.constant 5.000000e-01 : f32
    %298 = vector.broadcast %cst_132 : f32 to vector<8x128xf32>
    %299 = arith.mulf %298, %297 : vector<8x128xf32>
    %300 = math.tanh %299 : vector<8x128xf32>
    %cst_133 = arith.constant 5.000000e-01 : f32
    %301 = vector.broadcast %cst_133 : f32 to vector<8x128xf32>
    %302 = arith.mulf %301, %300 : vector<8x128xf32>
    %cst_134 = arith.constant 5.000000e-01 : f32
    %303 = vector.broadcast %cst_134 : f32 to vector<8x128xf32>
    %304 = arith.addf %302, %303 : vector<8x128xf32>
    %305 = vector.extract_strided_slice %288 {offsets = [0, 256], sizes = [8, 128], strides = [1, 1]} : vector<8x512xf32> to vector<8x128xf32>
    %306 = math.tanh %305 : vector<8x128xf32>
    %307 = vector.extract_strided_slice %288 {offsets = [0, 384], sizes = [8, 128], strides = [1, 1]} : vector<8x512xf32> to vector<8x128xf32>
    %cst_135 = arith.constant 5.000000e-01 : f32
    %308 = vector.broadcast %cst_135 : f32 to vector<8x128xf32>
    %309 = arith.mulf %308, %307 : vector<8x128xf32>
    %310 = math.tanh %309 : vector<8x128xf32>
    %cst_136 = arith.constant 5.000000e-01 : f32
    %311 = vector.broadcast %cst_136 : f32 to vector<8x128xf32>
    %312 = arith.mulf %311, %310 : vector<8x128xf32>
    %cst_137 = arith.constant 5.000000e-01 : f32
    %313 = vector.broadcast %cst_137 : f32 to vector<8x128xf32>
    %314 = arith.addf %312, %313 : vector<8x128xf32>
    %315 = arith.mulf %304, %281 : vector<8x128xf32>
    %316 = arith.mulf %296, %306 : vector<8x128xf32>
    %317 = arith.addf %315, %316 : vector<8x128xf32>
    %318 = math.tanh %317 : vector<8x128xf32>
    %319 = arith.mulf %314, %318 : vector<8x128xf32>
    %c56_138 = arith.constant 56 : index
    %c0_139 = arith.constant 0 : index
    %320 = vector.load %arg7[%c56_138, %c0_139] : memref<64x512xf32, #tpu.memory_space<vmem>>, vector<8x512xf32>
    %321 = arith.truncf %319 : vector<8x128xf32> to vector<8x128xbf16>
    %c0_140 = arith.constant 0 : index
    %c0_141 = arith.constant 0 : index
    %322 = vector.load %arg3[%c0_140, %c0_141] : memref<128x512xbf16, #tpu.memory_space<vmem>>, vector<128x512xbf16>
    %cst_142 = arith.constant dense<0.000000e+00> : vector<8x512xf32>
    %323 = tpu.matmul %321, %322, %cst_142 {dimension_numbers = #tpu.dot_dimension_numbers<[1], [0], [0], [1], [0, 0, 1, 1], [], []>} : vector<8x128xbf16>, vector<128x512xbf16>, vector<8x512xf32> -> vector<8x512xf32>
    %324 = arith.addf %320, %323 : vector<8x512xf32>
    %325 = vector.extract_strided_slice %324 {offsets = [0, 0], sizes = [8, 128], strides = [1, 1]} : vector<8x512xf32> to vector<8x128xf32>
    %cst_143 = arith.constant 5.000000e-01 : f32
    %326 = vector.broadcast %cst_143 : f32 to vector<8x128xf32>
    %327 = arith.mulf %326, %325 : vector<8x128xf32>
    %328 = math.tanh %327 : vector<8x128xf32>
    %cst_144 = arith.constant 5.000000e-01 : f32
    %329 = vector.broadcast %cst_144 : f32 to vector<8x128xf32>
    %330 = arith.mulf %329, %328 : vector<8x128xf32>
    %cst_145 = arith.constant 5.000000e-01 : f32
    %331 = vector.broadcast %cst_145 : f32 to vector<8x128xf32>
    %332 = arith.addf %330, %331 : vector<8x128xf32>
    %333 = vector.extract_strided_slice %324 {offsets = [0, 128], sizes = [8, 128], strides = [1, 1]} : vector<8x512xf32> to vector<8x128xf32>
    %cst_146 = arith.constant 5.000000e-01 : f32
    %334 = vector.broadcast %cst_146 : f32 to vector<8x128xf32>
    %335 = arith.mulf %334, %333 : vector<8x128xf32>
    %336 = math.tanh %335 : vector<8x128xf32>
    %cst_147 = arith.constant 5.000000e-01 : f32
    %337 = vector.broadcast %cst_147 : f32 to vector<8x128xf32>
    %338 = arith.mulf %337, %336 : vector<8x128xf32>
    %cst_148 = arith.constant 5.000000e-01 : f32
    %339 = vector.broadcast %cst_148 : f32 to vector<8x128xf32>
    %340 = arith.addf %338, %339 : vector<8x128xf32>
    %341 = vector.extract_strided_slice %324 {offsets = [0, 256], sizes = [8, 128], strides = [1, 1]} : vector<8x512xf32> to vector<8x128xf32>
    %342 = math.tanh %341 : vector<8x128xf32>
    %343 = vector.extract_strided_slice %324 {offsets = [0, 384], sizes = [8, 128], strides = [1, 1]} : vector<8x512xf32> to vector<8x128xf32>
    %cst_149 = arith.constant 5.000000e-01 : f32
    %344 = vector.broadcast %cst_149 : f32 to vector<8x128xf32>
    %345 = arith.mulf %344, %343 : vector<8x128xf32>
    %346 = math.tanh %345 : vector<8x128xf32>
    %cst_150 = arith.constant 5.000000e-01 : f32
    %347 = vector.broadcast %cst_150 : f32 to vector<8x128xf32>
    %348 = arith.mulf %347, %346 : vector<8x128xf32>
    %cst_151 = arith.constant 5.000000e-01 : f32
    %349 = vector.broadcast %cst_151 : f32 to vector<8x128xf32>
    %350 = arith.addf %348, %349 : vector<8x128xf32>
    %351 = arith.mulf %340, %317 : vector<8x128xf32>
    %352 = arith.mulf %332, %342 : vector<8x128xf32>
    %353 = arith.addf %351, %352 : vector<8x128xf32>
    %354 = math.tanh %353 : vector<8x128xf32>
    %355 = arith.mulf %350, %354 : vector<8x128xf32>
    %356 = arith.truncf %355 : vector<8x128xf32> to vector<8x128xbf16>
    %c0_152 = arith.constant 0 : index
    %c0_153 = arith.constant 0 : index
    %357 = vector.load %arg4[%c0_152, %c0_153] : memref<128x128xbf16, #tpu.memory_space<vmem>>, vector<128x128xbf16>
    %cst_154 = arith.constant dense<0.000000e+00> : vector<8x128xf32>
    %358 = tpu.matmul %356, %357, %cst_154 {dimension_numbers = #tpu.dot_dimension_numbers<[1], [0], [0], [1], [0, 0, 1, 1], [], []>} : vector<8x128xbf16>, vector<128x128xbf16>, vector<8x128xf32> -> vector<8x128xf32>
    %c0_155 = arith.constant 0 : index
    %c0_156 = arith.constant 0 : index
    %359 = vector.load %arg5[%c0_155, %c0_156] : memref<1x128xf32, #tpu.memory_space<vmem>>, vector<1x128xf32>
    %360 = vector.broadcast %359 : vector<1x128xf32> to vector<8x128xf32>
    %361 = arith.addf %358, %360 : vector<8x128xf32>
    %c0_157 = arith.constant 0 : index
    %c0_158 = arith.constant 0 : index
    %362 = vector.load %arg6[%c0_157, %c0_158] : memref<8x128xf32, #tpu.memory_space<vmem>>, vector<8x128xf32>
    tpu.vector_store %arg6[%c0_157, %c0_158], %361 {strides = array<i32>} : memref<8x128xf32, #tpu.memory_space<vmem>>, vector<8x128xf32>,
    return
  }
  func.func @transform_0(%arg0: i32, %arg1: memref<16xi32, #tpu.memory_space<smem>>) -> (i32, i32) {
    %c0_i32 = arith.constant 0 : i32
    %c0_i32_0 = arith.constant 0 : i32
    %c0_i32_1 = arith.constant 0 : i32
    return %c0_i32, %c0_i32_0 : i32, i32
  }
  func.func @transform_1(%arg0: i32, %arg1: memref<16xi32, #tpu.memory_space<smem>>) -> (i32, i32) {
    %c0_i32 = arith.constant 0 : i32
    %c0_i32_0 = arith.constant 0 : i32
    %c0_i32_1 = arith.constant 0 : i32
    return %c0_i32, %c0_i32_0 : i32, i32
  }
  func.func @transform_2(%arg0: i32, %arg1: memref<16xi32, #tpu.memory_space<smem>>) -> (i32, i32) {
    %c0_i32 = arith.constant 0 : i32
    %c0_i32_0 = arith.constant 0 : i32
    %c0_i32_1 = arith.constant 0 : i32
    return %c0_i32, %c0_i32_0 : i32, i32
  }
  func.func @transform_3(%arg0: i32, %arg1: memref<16xi32, #tpu.memory_space<smem>>) -> (i32, i32) {
    %c0_i32 = arith.constant 0 : i32
    %c0_i32_0 = arith.constant 0 : i32
    %c0_i32_1 = arith.constant 0 : i32
    return %c0_i32, %c0_i32_0 : i32, i32
  }
  func.func @transform_4(%arg0: i32, %arg1: memref<16xi32, #tpu.memory_space<smem>>) -> (i32, i32) {
    %c0_i32 = arith.constant 0 : i32
    %c0_i32_0 = arith.constant 0 : i32
    %c0_i32_1 = arith.constant 0 : i32
    return %c0_i32, %c0_i32_0 : i32, i32
  }
}

</mosaic_0001>

<llo_original>
// kernel: policy_network_forward.1
$region0: #{policy_network_forward.1}
  #allocation0 [shape = 'u32[]', space=smem, size = 0x4, offset = 0x4, fixed_abs, tag = 'smem constant byte address 0x4 - core index']
  #allocation1 [shape = 'u32[72,128]{1,0:T(1,128)}', space=vmem, size = 0x9000, scoped, tag = 'internal scratch']
  #allocation2 [shape = 'f32[64,512]{1,0:T(8,128)}', space=vmem, size = 0x20000, scoped, tag = 'scratch operand']
  #allocation3 [shape = 's32[1]{0}', space=sflag, size = 0x4, scoped, tag = 'scoped memory for policy_network_forward.1']
  #allocation4 [shape = 'u8[512]{0}', space=smem, size = 0x200, scoped, tag = 'prefetched SMEM operand 0']
  %s0 = inlined_call_operand.vmem [shape: s32[16], index: 0, kind: input, shape index: {}]
  %s1 = inlined_call_operand.vmem [shape: f32[16,512], index: 1, kind: input, shape index: {}]
  %s2 = inlined_call_operand.hbm [shape: bf16[128,512], index: 2, kind: input, shape index: {}]
  %s3 = inlined_call_operand.vmem [shape: bf16[128,128], index: 3, kind: input, shape index: {}]
  %s4 = inlined_call_operand.vmem [shape: f32[1,128], index: 4, kind: input, shape index: {}]
  %s5 = inlined_call_operand.vmem [shape: f32[8,128], index: 5, kind: output, shape index: {}]
  %s6 = sld [smem:[#allocation0]]
  $region30: #{policy_network_forward.1} parent=0
    _
  %s8 = ssub.s32 1, %s6
  %s9 = scalar_select 0, %s8, %s6
  %s11 = sshll.u32 %s0, 4
  %s12 = int_to_ptr.vmem [resolvable:$true] %s11
  %14 = dma.vmem_to_smem %s12, 16, [#allocation4], [#allocation3]
  %16 = dma.done [#allocation3], 16
  %17 = sfence
  $region1: #{policy_network_forward.1} parent=0
    #allocation5 [shape = 'u8[131072]{0}', space=vmem, size = 0x20000, scoped, tag = 'input window, operand 2, single buffered']
    #allocation6 [shape = 's32[1]{0}', space=sflag, size = 0x4, scoped, tag = 'scoped memory for policy_network_forward.1']
    %18 = vsyncpa [#allocation6], 0
    // Predicated region
    $region2: #{policy_network_forward.1} parent=1 // pred_check
      _
    $region3: #{policy_network_forward.1} parent=1 // pred_check_branch
      %20 = sbr.rel (0) target = $region5
    $region4: #{policy_network_forward.1} parent=1 // pred_region
      _
    $region5: #{policy_network_forward.1} parent=1 // pred_fallthru
      _
    // Predicated region
    $region6: #{policy_network_forward.1} parent=1 // pred_check
      _
    $region7: #{policy_network_forward.1} parent=1 // pred_check_branch
      %22 = sbr.rel (0) target = $region9
    $region8: #{policy_network_forward.1} parent=1 // pred_region
      %24 = vsyncadd [#allocation6], 0
      %s25 = sshll.u32 %s2, 4
      %s26 = int_to_ptr.hbm [resolvable:$true] %s25
      %s27 = sshll.u32 [#allocation5], 4
      %s28 = int_to_ptr.vmem [resolvable:$true] %s27
      %33 = dma.hbm_to_vmem [thread:$0]  %s26, 4096, %s28, [#allocation6], 256, 256, 16
    $region9: #{policy_network_forward.1} parent=1 // pred_fallthru
      _
    // Predicated region
    $region10: #{policy_network_forward.1} parent=1 // pred_check
      _
    $region11: #{policy_network_forward.1} parent=1 // pred_check_branch
      %35 = sbr.rel (0) target = $region13
    $region12: #{policy_network_forward.1} parent=1 // pred_region
      _
    $region13: #{policy_network_forward.1} parent=1 // pred_fallthru
      _
    // Predicated region
    $region14: #{policy_network_forward.1} parent=1 // pred_check
      _
    $region15: #{policy_network_forward.1} parent=1 // pred_check_branch
      %37 = sbr.rel (0) target = $region17
    $region16: #{policy_network_forward.1} parent=1 // pred_region
      _
    $region17: #{policy_network_forward.1} parent=1 // pred_fallthru
      _
    // Predicated region
    $region18: #{policy_network_forward.1} parent=1 // pred_check
      _
    $region19: #{policy_network_forward.1} parent=1 // pred_check_branch
      %39 = sbr.rel (0) target = $region21
    $region20: #{policy_network_forward.1} parent=1 // pred_region
      %41 = dma.done [#allocation6], 4096
    $region21: #{policy_network_forward.1} parent=1 // pred_fallthru
      _
    %43 = vst [vmem:[#allocation2] sm:$0xff] 0.0
    %44 = vst [vmem:[#allocation2 + $0x8] sm:$0xff] 0.0
    %45 = vst [vmem:[#allocation2 + $0x10] sm:$0xff] 0.0
    %46 = vst [vmem:[#allocation2 + $0x18] sm:$0xff] 0.0
    %47 = vst [vmem:[#allocation2 + $0x20] sm:$0xff] 0.0
    %48 = vst [vmem:[#allocation2 + $0x28] sm:$0xff] 0.0
    %49 = vst [vmem:[#allocation2 + $0x30] sm:$0xff] 0.0
    %50 = vst [vmem:[#allocation2 + $0x38] sm:$0xff] 0.0
    %51 = vst [vmem:[#allocation2 + $0x40] sm:$0xff] 0.0
    %52 = vst [vmem:[#allocation2 + $0x48] sm:$0xff] 0.0
    %53 = vst [vmem:[#allocation2 + $0x50] sm:$0xff] 0.0
    %54 = vst [vmem:[#allocation2 + $0x58] sm:$0xff] 0.0
    %55 = vst [vmem:[#allocation2 + $0x60] sm:$0xff] 0.0
    %56 = vst [vmem:[#allocation2 + $0x68] sm:$0xff] 0.0
    %57 = vst [vmem:[#allocation2 + $0x70] sm:$0xff] 0.0
    %58 = vst [vmem:[#allocation2 + $0x78] sm:$0xff] 0.0
    %59 = vst [vmem:[#allocation2 + $0x80] sm:$0xff] 0.0
    %60 = vst [vmem:[#allocation2 + $0x88] sm:$0xff] 0.0
    %61 = vst [vmem:[#allocation2 + $0x90] sm:$0xff] 0.0
    %62 = vst [vmem:[#allocation2 + $0x98] sm:$0xff] 0.0
    %63 = vst [vmem:[#allocation2 + $0xa0] sm:$0xff] 0.0
    %64 = vst [vmem:[#allocation2 + $0xa8] sm:$0xff] 0.0
    %65 = vst [vmem:[#allocation2 + $0xb0] sm:$0xff] 0.0
    %66 = vst [vmem:[#allocation2 + $0xb8] sm:$0xff] 0.0
    %67 = vst [vmem:[#allocation2 + $0xc0] sm:$0xff] 0.0
    %68 = vst [vmem:[#allocation2 + $0xc8] sm:$0xff] 0.0
    %69 = vst [vmem:[#allocation2 + $0xd0] sm:$0xff] 0.0
    %70 = vst [vmem:[#allocation2 + $0xd8] sm:$0xff] 0.0
    %71 = vst [vmem:[#allocation2 + $0xe0] sm:$0xff] 0.0
    %72 = vst [vmem:[#allocation2 + $0xe8] sm:$0xff] 0.0
    %73 = vst [vmem:[#allocation2 + $0xf0] sm:$0xff] 0.0
    %74 = vst [vmem:[#allocation2 + $0xf8] sm:$0xff] 0.0
    %s75 = sld [smem:[#allocation4]]
    %s76 = sshra.s32 %s75, 3
    %s77 = sand.u32 %s75, 7
    %s78 = sshra.s32 %s75, 3
    %s79 = sand.u32 %s75, 7
    %s80 = smul.u32 %s76, 4
    %s81 = smul.u32 %s80, 8
    %s82 = sadd.s32 %s81, %s79
    %s83 = scalar_lea.vmem %s1, %s82
    %v84 = vld [vmem:[%s83] ss:$8 sm:$0xf]
    %v85 = vlaneseq
    %vm86 = vcmp.ge.s32.totalorder %v85, 0
    %vm87 = vcmp.lt.s32.totalorder %v85, 512
    %vm88 = vmand %vm86, %vm87
    %89 = vst.msk [vmem:[#allocation2] ss:$8 sm:$0xf] %vm88, %v84
    %90 = vst.msk [vmem:[#allocation2] ss:$8 sm:$0x0] %vm88, %v84
    %s91 = sld [smem:[#allocation4 + $0x8]]
    %s92 = sshra.s32 %s91, 3
    %s93 = sand.u32 %s91, 7
    %s94 = sshra.s32 %s91, 3
    %s95 = sand.u32 %s91, 7
    %s96 = smul.u32 %s92, 4
    %s97 = smul.u32 %s96, 8
    %s98 = sadd.s32 %s97, %s95
    %s99 = scalar_lea.vmem %s1, %s98
    %v100 = vld [vmem:[%s99] ss:$8 sm:$0xf]
    %s101 = scalar_lea.vmem [#allocation2], 1
    %102 = vst.msk [vmem:[%s101] ss:$8 sm:$0xf] %vm88, %v100
    %103 = vst.msk [vmem:[%s101] ss:$8 sm:$0x0] %vm88, %v100
    %s104 = sld [smem:[#allocation4 + $0x1]]
    %s105 = sshra.s32 %s104, 3
    %s106 = sand.u32 %s104, 7
    %s107 = sshra.s32 %s104, 3
    %s108 = sand.u32 %s104, 7
    %s109 = smul.u32 %s105, 4
    %s110 = smul.u32 %s109, 8
    %s111 = sadd.s32 %s110, %s108
    %s112 = scalar_lea.vmem %s1, %s111
    %v113 = vld [vmem:[%s112] ss:$8 sm:$0xf]
    %s114 = scalar_lea.vmem [#allocation2], 32
    %115 = vst.msk [vmem:[%s114] ss:$8 sm:$0xf] %vm88, %v113
    %116 = vst.msk [vmem:[%s114] ss:$8 sm:$0x0] %vm88, %v113
    %s117 = sld [smem:[#allocation4 + $0x9]]
    %s118 = sshra.s32 %s117, 3
    %s119 = sand.u32 %s117, 7
    %s120 = sshra.s32 %s117, 3
    %s121 = sand.u32 %s117, 7
    %s122 = smul.u32 %s118, 4
    %s123 = smul.u32 %s122, 8
    %s124 = sadd.s32 %s123, %s121
    %s125 = scalar_lea.vmem %s1, %s124
    %v126 = vld [vmem:[%s125] ss:$8 sm:$0xf]
    %s127 = scalar_lea.vmem [#allocation2], 33
    %128 = vst.msk [vmem:[%s127] ss:$8 sm:$0xf] %vm88, %v126
    %129 = vst.msk [vmem:[%s127] ss:$8 sm:$0x0] %vm88, %v126
    %s130 = sld [smem:[#allocation4 + $0x2]]
    %s131 = sshra.s32 %s130, 3
    %s132 = sand.u32 %s130, 7
    %s133 = sshra.s32 %s130, 3
    %s134 = sand.u32 %s130, 7
    %s135 = smul.u32 %s131, 4
    %s136 = smul.u32 %s135, 8
    %s137 = sadd.s32 %s136, %s134
    %s138 = scalar_lea.vmem %s1, %s137
    %v139 = vld [vmem:[%s138] ss:$8 sm:$0xf]
    %s140 = scalar_lea.vmem [#allocation2], 64
    %141 = vst.msk [vmem:[%s140] ss:$8 sm:$0xf] %vm88, %v139
    %142 = vst.msk [vmem:[%s140] ss:$8 sm:$0x0] %vm88, %v139
    %s143 = sld [smem:[#allocation4 + $0xa]]
    %s144 = sshra.s32 %s143, 3
    %s145 = sand.u32 %s143, 7
    %s146 = sshra.s32 %s143, 3
    %s147 = sand.u32 %s143, 7
    %s148 = smul.u32 %s144, 4
    %s149 = smul.u32 %s148, 8
    %s150 = sadd.s32 %s149, %s147
    %s151 = scalar_lea.vmem %s1, %s150
    %v152 = vld [vmem:[%s151] ss:$8 sm:$0xf]
    %s153 = scalar_lea.vmem [#allocation2], 65
    %154 = vst.msk [vmem:[%s153] ss:$8 sm:$0xf] %vm88, %v152
    %155 = vst.msk [vmem:[%s153] ss:$8 sm:$0x0] %vm88, %v152
    %s156 = sld [smem:[#allocation4 + $0x3]]
    %s157 = sshra.s32 %s156, 3
    %s158 = sand.u32 %s156, 7
    %s159 = sshra.s32 %s156, 3
    %s160 = sand.u32 %s156, 7
    %s161 = smul.u32 %s157, 4
    %s162 = smul.u32 %s161, 8
    %s163 = sadd.s32 %s162, %s160
    %s164 = scalar_lea.vmem %s1, %s163
    %v165 = vld [vmem:[%s164] ss:$8 sm:$0xf]
    %s166 = scalar_lea.vmem [#allocation2], 96
    %167 = vst.msk [vmem:[%s166] ss:$8 sm:$0xf] %vm88, %v165
    %168 = vst.msk [vmem:[%s166] ss:$8 sm:$0x0] %vm88, %v165
    %s169 = sld [smem:[#allocation4 + $0xb]]
    %s170 = sshra.s32 %s169, 3
    %s171 = sand.u32 %s169, 7
    %s172 = sshra.s32 %s169, 3
    %s173 = sand.u32 %s169, 7
    %s174 = smul.u32 %s170, 4
    %s175 = smul.u32 %s174, 8
    %s176 = sadd.s32 %s175, %s173
    %s177 = scalar_lea.vmem %s1, %s176
    %v178 = vld [vmem:[%s177] ss:$8 sm:$0xf]
    %s179 = scalar_lea.vmem [#allocation2], 97
    %180 = vst.msk [vmem:[%s179] ss:$8 sm:$0xf] %vm88, %v178
    %181 = vst.msk [vmem:[%s179] ss:$8 sm:$0x0] %vm88, %v178
    %s182 = sld [smem:[#allocation4 + $0x4]]
    %s183 = sshra.s32 %s182, 3
    %s184 = sand.u32 %s182, 7
    %s185 = sshra.s32 %s182, 3
    %s186 = sand.u32 %s182, 7
    %s187 = smul.u32 %s183, 4
    %s188 = smul.u32 %s187, 8
    %s189 = sadd.s32 %s188, %s186
    %s190 = scalar_lea.vmem %s1, %s189
    %v191 = vld [vmem:[%s190] ss:$8 sm:$0xf]
    %s192 = scalar_lea.vmem [#allocation2], 128
    %193 = vst.msk [vmem:[%s192] ss:$8 sm:$0xf] %vm88, %v191
    %194 = vst.msk [vmem:[%s192] ss:$8 sm:$0x0] %vm88, %v191
    %s195 = sld [smem:[#allocation4 + $0xc]]
    %s196 = sshra.s32 %s195, 3
    %s197 = sand.u32 %s195, 7
    %s198 = sshra.s32 %s195, 3
    %s199 = sand.u32 %s195, 7
    %s200 = smul.u32 %s196, 4
    %s201 = smul.u32 %s200, 8
    %s202 = sadd.s32 %s201, %s199
    %s203 = scalar_lea.vmem %s1, %s202
    %v204 = vld [vmem:[%s203] ss:$8 sm:$0xf]
    %s205 = scalar_lea.vmem [#allocation2], 129
    %206 = vst.msk [vmem:[%s205] ss:$8 sm:$0xf] %vm88, %v204
    %207 = vst.msk [vmem:[%s205] ss:$8 sm:$0x0] %vm88, %v204
    %s208 = sld [smem:[#allocation4 + $0x5]]
    %s209 = sshra.s32 %s208, 3
    %s210 = sand.u32 %s208, 7
    %s211 = sshra.s32 %s208, 3
    %s212 = sand.u32 %s208, 7
    %s213 = smul.u32 %s209, 4
    %s214 = smul.u32 %s213, 8
    %s215 = sadd.s32 %s214, %s212
    %s216 = scalar_lea.vmem %s1, %s215
    %v217 = vld [vmem:[%s216] ss:$8 sm:$0xf]
    %s218 = scalar_lea.vmem [#allocation2], 160
    %219 = vst.msk [vmem:[%s218] ss:$8 sm:$0xf] %vm88, %v217
    %220 = vst.msk [vmem:[%s218] ss:$8 sm:$0x0] %vm88, %v217
    %s221 = sld [smem:[#allocation4 + $0xd]]
    %s222 = sshra.s32 %s221, 3
    %s223 = sand.u32 %s221, 7
    %s224 = sshra.s32 %s221, 3
    %s225 = sand.u32 %s221, 7
    %s226 = smul.u32 %s222, 4
    %s227 = smul.u32 %s226, 8
    %s228 = sadd.s32 %s227, %s225
    %s229 = scalar_lea.vmem %s1, %s228
    %v230 = vld [vmem:[%s229] ss:$8 sm:$0xf]
    %s231 = scalar_lea.vmem [#allocation2], 161
    %232 = vst.msk [vmem:[%s231] ss:$8 sm:$0xf] %vm88, %v230
    %233 = vst.msk [vmem:[%s231] ss:$8 sm:$0x0] %vm88, %v230
    %s234 = sld [smem:[#allocation4 + $0x6]]
    %s235 = sshra.s32 %s234, 3
    %s236 = sand.u32 %s234, 7
    %s237 = sshra.s32 %s234, 3
    %s238 = sand.u32 %s234, 7
    %s239 = smul.u32 %s235, 4
    %s240 = smul.u32 %s239, 8
    %s241 = sadd.s32 %s240, %s238
    %s242 = scalar_lea.vmem %s1, %s241
    %v243 = vld [vmem:[%s242] ss:$8 sm:$0xf]
    %s244 = scalar_lea.vmem [#allocation2], 192
    %245 = vst.msk [vmem:[%s244] ss:$8 sm:$0xf] %vm88, %v243
    %246 = vst.msk [vmem:[%s244] ss:$8 sm:$0x0] %vm88, %v243
    %s247 = sld [smem:[#allocation4 + $0xe]]
    %s248 = sshra.s32 %s247, 3
    %s249 = sand.u32 %s247, 7
    %s250 = sshra.s32 %s247, 3
    %s251 = sand.u32 %s247, 7
    %s252 = smul.u32 %s248, 4
    %s253 = smul.u32 %s252, 8
    %s254 = sadd.s32 %s253, %s251
    %s255 = scalar_lea.vmem %s1, %s254
    %v256 = vld [vmem:[%s255] ss:$8 sm:$0xf]
    %s257 = scalar_lea.vmem [#allocation2], 193
    %258 = vst.msk [vmem:[%s257] ss:$8 sm:$0xf] %vm88, %v256
    %259 = vst.msk [vmem:[%s257] ss:$8 sm:$0x0] %vm88, %v256
    %s260 = sld [smem:[#allocation4 + $0x7]]
    %s261 = sshra.s32 %s260, 3
    %s262 = sand.u32 %s260, 7
    %s263 = sshra.s32 %s260, 3
    %s264 = sand.u32 %s260, 7
    %s265 = smul.u32 %s261, 4
    %s266 = smul.u32 %s265, 8
    %s267 = sadd.s32 %s266, %s264
    %s268 = scalar_lea.vmem %s1, %s267
    %v269 = vld [vmem:[%s268] ss:$8 sm:$0xf]
    %s270 = scalar_lea.vmem [#allocation2], 224
    %271 = vst.msk [vmem:[%s270] ss:$8 sm:$0xf] %vm88, %v269
    %272 = vst.msk [vmem:[%s270] ss:$8 sm:$0x0] %vm88, %v269
    %s273 = sld [smem:[#allocation4 + $0xf]]
    %s274 = sshra.s32 %s273, 3
    %s275 = sand.u32 %s273, 7
    %s276 = sshra.s32 %s273, 3
    %s277 = sand.u32 %s273, 7
    %s278 = smul.u32 %s274, 4
    %s279 = smul.u32 %s278, 8
    %s280 = sadd.s32 %s279, %s277
    %s281 = scalar_lea.vmem %s1, %s280
    %v282 = vld [vmem:[%s281] ss:$8 sm:$0xf]
    %s283 = scalar_lea.vmem [#allocation2], 225
    %284 = vst.msk [vmem:[%s283] ss:$8 sm:$0xf] %vm88, %v282
    %285 = vst.msk [vmem:[%s283] ss:$8 sm:$0x0] %vm88, %v282
    %v286 = vld [vmem:[#allocation2] sm:$0xff]
    %v287 = vld [vmem:[#allocation2 + $0x8] sm:$0xff]
    %v288 = vld [vmem:[#allocation2 + $0x10] sm:$0xff]
    %v289 = vld [vmem:[#allocation2 + $0x18] sm:$0xff]
    %v290 = vld [vmem:[#allocation5] sm:$0xff]
    %v291 = vld [vmem:[#allocation5 + $0x8] sm:$0xff]
    %v292 = vld [vmem:[#allocation5 + $0x10] sm:$0xff]
    %v293 = vld [vmem:[#allocation5 + $0x18] sm:$0xff]
    %v294 = vld [vmem:[#allocation5 + $0x20] sm:$0xff]
    %v295 = vld [vmem:[#allocation5 + $0x28] sm:$0xff]
    %v296 = vld [vmem:[#allocation5 + $0x30] sm:$0xff]
    %v297 = vld [vmem:[#allocation5 + $0x38] sm:$0xff]
    %v298 = vld [vmem:[#allocation5 + $0x40] sm:$0xff]
    %v299 = vld [vmem:[#allocation5 + $0x48] sm:$0xff]
    %v300 = vld [vmem:[#allocation5 + $0x50] sm:$0xff]
    %v301 = vld [vmem:[#allocation5 + $0x58] sm:$0xff]
    %v302 = vld [vmem:[#allocation5 + $0x60] sm:$0xff]
    %v303 = vld [vmem:[#allocation5 + $0x68] sm:$0xff]
    %v304 = vld [vmem:[#allocation5 + $0x70] sm:$0xff]
    %v305 = vld [vmem:[#allocation5 + $0x78] sm:$0xff]
    %v306 = vld [vmem:[#allocation5 + $0x80] sm:$0xff]
    %v307 = vld [vmem:[#allocation5 + $0x88] sm:$0xff]
    %v308 = vld [vmem:[#allocation5 + $0x90] sm:$0xff]
    %v309 = vld [vmem:[#allocation5 + $0x98] sm:$0xff]
    %v310 = vld [vmem:[#allocation5 + $0xa0] sm:$0xff]
    %v311 = vld [vmem:[#allocation5 + $0xa8] sm:$0xff]
    %v312 = vld [vmem:[#allocation5 + $0xb0] sm:$0xff]
    %v313 = vld [vmem:[#allocation5 + $0xb8] sm:$0xff]
    %v314 = vld [vmem:[#allocation5 + $0xc0] sm:$0xff]
    %v315 = vld [vmem:[#allocation5 + $0xc8] sm:$0xff]
    %v316 = vld [vmem:[#allocation5 + $0xd0] sm:$0xff]
    %v317 = vld [vmem:[#allocation5 + $0xd8] sm:$0xff]
    %v318 = vld [vmem:[#allocation5 + $0xe0] sm:$0xff]
    %v319 = vld [vmem:[#allocation5 + $0xe8] sm:$0xff]
    %v320 = vld [vmem:[#allocation5 + $0xf0] sm:$0xff]
    %v321 = vld [vmem:[#allocation5 + $0xf8] sm:$0xff]
    %v354 = vunpack.c.l.b16 %v290
    %v355 = vunpack.c.h.b16 %v290
    %v356 = vunpack.c.l.b16 %v291
    %v357 = vunpack.c.h.b16 %v291
    %v358 = vunpack.c.l.b16 %v292
    %v359 = vunpack.c.h.b16 %v292
    %v360 = vunpack.c.l.b16 %v293
    %v361 = vunpack.c.h.b16 %v293
    %v362 = vunpack.c.l.b16 %v294
    %v363 = vunpack.c.h.b16 %v294
    %v364 = vunpack.c.l.b16 %v295
    %v365 = vunpack.c.h.b16 %v295
    %v366 = vunpack.c.l.b16 %v296
    %v367 = vunpack.c.h.b16 %v296
    %v368 = vunpack.c.l.b16 %v297
    %v369 = vunpack.c.h.b16 %v297
    %v370 = vunpack.c.l.b16 %v298
    %v371 = vunpack.c.h.b16 %v298
    %v372 = vunpack.c.l.b16 %v299
    %v373 = vunpack.c.h.b16 %v299
    %v374 = vunpack.c.l.b16 %v300
    %v375 = vunpack.c.h.b16 %v300
    %v376 = vunpack.c.l.b16 %v301
    %v377 = vunpack.c.h.b16 %v301
    %v378 = vunpack.c.l.b16 %v302
    %v379 = vunpack.c.h.b16 %v302
    %v380 = vunpack.c.l.b16 %v303
    %v381 = vunpack.c.h.b16 %v303
    %v382 = vunpack.c.l.b16 %v304
    %v383 = vunpack.c.h.b16 %v304
    %v384 = vunpack.c.l.b16 %v305
    %v385 = vunpack.c.h.b16 %v305
    %v386 = vunpack.c.l.b16 %v306
    %v387 = vunpack.c.h.b16 %v306
    %v388 = vunpack.c.l.b16 %v307
    %v389 = vunpack.c.h.b16 %v307
    %v390 = vunpack.c.l.b16 %v308
    %v391 = vunpack.c.h.b16 %v308
    %v392 = vunpack.c.l.b16 %v309
    %v393 = vunpack.c.h.b16 %v309
    %v394 = vunpack.c.l.b16 %v310
    %v395 = vunpack.c.h.b16 %v310
    %v396 = vunpack.c.l.b16 %v311
    %v397 = vunpack.c.h.b16 %v311
    %v398 = vunpack.c.l.b16 %v312
    %v399 = vunpack.c.h.b16 %v312
    %v400 = vunpack.c.l.b16 %v313
    %v401 = vunpack.c.h.b16 %v313
    %v402 = vunpack.c.l.b16 %v314
    %v403 = vunpack.c.h.b16 %v314
    %v404 = vunpack.c.l.b16 %v315
    %v405 = vunpack.c.h.b16 %v315
    %v406 = vunpack.c.l.b16 %v316
    %v407 = vunpack.c.h.b16 %v316
    %v408 = vunpack.c.l.b16 %v317
    %v409 = vunpack.c.h.b16 %v317
    %v410 = vunpack.c.l.b16 %v318
    %v411 = vunpack.c.h.b16 %v318
    %v412 = vunpack.c.l.b16 %v319
    %v413 = vunpack.c.h.b16 %v319
    %v414 = vunpack.c.l.b16 %v320
    %v415 = vunpack.c.h.b16 %v320
    %v416 = vunpack.c.l.b16 %v321
    %v417 = vunpack.c.h.b16 %v321
    %v418 = vpack.c.b16 %v358, %v354
    %v419 = vpack.c.b16 %v359, %v355
    %v420 = vpack.c.b16 %v360, %v356
    %v421 = vpack.c.b16 %v361, %v357
    %v422 = vpack.c.b16 %v366, %v362
    %v423 = vpack.c.b16 %v367, %v363
    %v424 = vpack.c.b16 %v368, %v364
    %v425 = vpack.c.b16 %v369, %v365
    %v426 = vpack.c.b16 %v374, %v370
    %v427 = vpack.c.b16 %v375, %v371
    %v428 = vpack.c.b16 %v376, %v372
    %v429 = vpack.c.b16 %v377, %v373
    %v430 = vpack.c.b16 %v382, %v378
    %v431 = vpack.c.b16 %v383, %v379
    %v432 = vpack.c.b16 %v384, %v380
    %v433 = vpack.c.b16 %v385, %v381
    %v434 = vpack.c.b16 %v390, %v386
    %v435 = vpack.c.b16 %v391, %v387
    %v436 = vpack.c.b16 %v392, %v388
    %v437 = vpack.c.b16 %v393, %v389
    %v438 = vpack.c.b16 %v398, %v394
    %v439 = vpack.c.b16 %v399, %v395
    %v440 = vpack.c.b16 %v400, %v396
    %v441 = vpack.c.b16 %v401, %v397
    %v442 = vpack.c.b16 %v406, %v402
    %v443 = vpack.c.b16 %v407, %v403
    %v444 = vpack.c.b16 %v408, %v404
    %v445 = vpack.c.b16 %v409, %v405
    %v446 = vpack.c.b16 %v414, %v410
    %v447 = vpack.c.b16 %v415, %v411
    %v448 = vpack.c.b16 %v416, %v412
    %v449 = vpack.c.b16 %v417, %v413
    %482 = vmatpush.bf16.msra.mxu0 %v446
    %483 = vmatpush.bf16.msra.mxu0 %v442
    %484 = vmatpush.bf16.msra.mxu0 %v438
    %485 = vmatpush.bf16.msra.mxu0 %v434
    %486 = vmatpush.bf16.msra.mxu0 %v430
    %487 = vmatpush.bf16.msra.mxu0 %v426
    %488 = vmatpush.bf16.msra.mxu0 %v422
    %489 = vmatpush.bf16.msra.mxu0 %v418
    %490 = vmatmul.bf16.gmra.mxu0 0
    %v491 = vpop.f32.mrf.mxu0
    %v492 = vadd.f32 0.0, %v491
    %v493 = vpop.f32.mrf.mxu0
    %494 = vdwg.mxu0
    %495 = vmatpush.bf16.msra.mxu0 %v447
    %496 = vmatpush.bf16.msra.mxu0 %v443
    %497 = vmatpush.bf16.msra.mxu0 %v439
    %498 = vmatpush.bf16.msra.mxu0 %v435
    %499 = vmatpush.bf16.msra.mxu0 %v431
    %500 = vmatpush.bf16.msra.mxu0 %v427
    %501 = vmatpush.bf16.msra.mxu0 %v423
    %502 = vmatpush.bf16.msra.mxu0 %v419
    %503 = vmatmul.bf16.gmra.mxu0 0
    %v504 = vpop.f32.mrf.mxu0
    %v505 = vadd.f32 0.0, %v504
    %v506 = vpop.f32.mrf.mxu0
    %507 = vdwg.mxu0
    %508 = vmatpush.bf16.msra.mxu0 %v448
    %509 = vmatpush.bf16.msra.mxu0 %v444
    %510 = vmatpush.bf16.msra.mxu0 %v440
    %511 = vmatpush.bf16.msra.mxu0 %v436
    %512 = vmatpush.bf16.msra.mxu0 %v432
    %513 = vmatpush.bf16.msra.mxu0 %v428
    %514 = vmatpush.bf16.msra.mxu0 %v424
    %515 = vmatpush.bf16.msra.mxu0 %v420
    %516 = vmatmul.bf16.gmra.mxu0 0
    %v517 = vpop.f32.mrf.mxu0
    %v518 = vadd.f32 0.0, %v517
    %v519 = vpop.f32.mrf.mxu0
    %520 = vdwg.mxu0
    %521 = vmatpush.bf16.msra.mxu0 %v449
    %522 = vmatpush.bf16.msra.mxu0 %v445
    %523 = vmatpush.bf16.msra.mxu0 %v441
    %524 = vmatpush.bf16.msra.mxu0 %v437
    %525 = vmatpush.bf16.msra.mxu0 %v433
    %526 = vmatpush.bf16.msra.mxu0 %v429
    %527 = vmatpush.bf16.msra.mxu0 %v425
    %528 = vmatpush.bf16.msra.mxu0 %v421
    %529 = vmatmul.bf16.gmra.mxu0 0
    %v530 = vpop.f32.mrf.mxu0
    %v531 = vadd.f32 0.0, %v530
    %v532 = vpop.f32.mrf.mxu0
    %533 = vdwg.mxu0
    %v534 = vadd.f32 %v286, %v492
    %v535 = vadd.f32 %v287, %v505
    %v536 = vadd.f32 %v288, %v518
    %v537 = vadd.f32 %v289, %v531
    %v538 = vmul.f32 %v534, 0.5
    %v539 = vtanh.pop %v538
    %v540 = vmul.f32 %v539, 0.5
    %v541 = vadd.f32 %v540, 0.5
    %v542 = vmul.f32 %v535, 0.5
    %v543 = vtanh.pop %v542
    %v544 = vmul.f32 %v543, 0.5
    %v545 = vadd.f32 %v544, 0.5
    %v546 = vtanh.pop %v536
    %v547 = vmul.f32 %v537, 0.5
    %v548 = vtanh.pop %v547
    %v549 = vmul.f32 %v548, 0.5
    %v550 = vadd.f32 %v549, 0.5
    %v551 = vmul.f32 %v545, 0.0
    %v552 = vmul.f32 %v541, %v546
    %v553 = vadd.f32 %v551, %v552
    %v554 = vtanh.pop %v553
    %v555 = vmul.f32 %v550, %v554
    %v556 = vld [vmem:[#allocation2 + $0x20] sm:$0xff]
    %v557 = vld [vmem:[#allocation2 + $0x28] sm:$0xff]
    %v558 = vld [vmem:[#allocation2 + $0x30] sm:$0xff]
    %v559 = vld [vmem:[#allocation2 + $0x38] sm:$0xff]
    %v560 = vpack.c.bf16 %v555, %v555
    %561 = vmatpush.bf16.msra.mxu0 %v446
    %562 = vmatpush.bf16.msra.mxu0 %v442
    %563 = vmatpush.bf16.msra.mxu0 %v438
    %564 = vmatpush.bf16.msra.mxu0 %v434
    %565 = vmatpush.bf16.msra.mxu0 %v430
    %566 = vmatpush.bf16.msra.mxu0 %v426
    %567 = vmatpush.bf16.msra.mxu0 %v422
    %568 = vmatpush.bf16.msra.mxu0 %v418
    %569 = vmatmul.bf16.gmra.mxu0 %v560
    %v570 = vpop.f32.mrf.mxu0
    %v571 = vadd.f32 0.0, %v570
    %v572 = vpop.f32.mrf.mxu0
    %573 = vdwg.mxu0
    %574 = vmatpush.bf16.msra.mxu0 %v447
    %575 = vmatpush.bf16.msra.mxu0 %v443
    %576 = vmatpush.bf16.msra.mxu0 %v439
    %577 = vmatpush.bf16.msra.mxu0 %v435
    %578 = vmatpush.bf16.msra.mxu0 %v431
    %579 = vmatpush.bf16.msra.mxu0 %v427
    %580 = vmatpush.bf16.msra.mxu0 %v423
    %581 = vmatpush.bf16.msra.mxu0 %v419
    %582 = vmatmul.bf16.gmra.mxu0 %v560
    %v583 = vpop.f32.mrf.mxu0
    %v584 = vadd.f32 0.0, %v583
    %v585 = vpop.f32.mrf.mxu0
    %586 = vdwg.mxu0
    %587 = vmatpush.bf16.msra.mxu0 %v448
    %588 = vmatpush.bf16.msra.mxu0 %v444
    %589 = vmatpush.bf16.msra.mxu0 %v440
    %590 = vmatpush.bf16.msra.mxu0 %v436
    %591 = vmatpush.bf16.msra.mxu0 %v432
    %592 = vmatpush.bf16.msra.mxu0 %v428
    %593 = vmatpush.bf16.msra.mxu0 %v424
    %594 = vmatpush.bf16.msra.mxu0 %v420
    %595 = vmatmul.bf16.gmra.mxu0 %v560
    %v596 = vpop.f32.mrf.mxu0
    %v597 = vadd.f32 0.0, %v596
    %v598 = vpop.f32.mrf.mxu0
    %599 = vdwg.mxu0
    %600 = vmatpush.bf16.msra.mxu0 %v449
    %601 = vmatpush.bf16.msra.mxu0 %v445
    %602 = vmatpush.bf16.msra.mxu0 %v441
    %603 = vmatpush.bf16.msra.mxu0 %v437
    %604 = vmatpush.bf16.msra.mxu0 %v433
    %605 = vmatpush.bf16.msra.mxu0 %v429
    %606 = vmatpush.bf16.msra.mxu0 %v425
    %607 = vmatpush.bf16.msra.mxu0 %v421
    %608 = vmatmul.bf16.gmra.mxu0 %v560
    %v609 = vpop.f32.mrf.mxu0
    %v610 = vadd.f32 0.0, %v609
    %v611 = vpop.f32.mrf.mxu0
    %612 = vdwg.mxu0
    %v613 = vadd.f32 %v556, %v571
    %v614 = vadd.f32 %v557, %v584
    %v615 = vadd.f32 %v558, %v597
    %v616 = vadd.f32 %v559, %v610
    %v617 = vmul.f32 %v613, 0.5
    %v618 = vtanh.pop %v617
    %v619 = vmul.f32 %v618, 0.5
    %v620 = vadd.f32 %v619, 0.5
    %v621 = vmul.f32 %v614, 0.5
    %v622 = vtanh.pop %v621
    %v623 = vmul.f32 %v622, 0.5
    %v624 = vadd.f32 %v623, 0.5
    %v625 = vtanh.pop %v615
    %v626 = vmul.f32 %v616, 0.5
    %v627 = vtanh.pop %v626
    %v628 = vmul.f32 %v627, 0.5
    %v629 = vadd.f32 %v628, 0.5
    %v630 = vmul.f32 %v624, %v553
    %v631 = vmul.f32 %v620, %v625
    %v632 = vadd.f32 %v630, %v631
    %v633 = vtanh.pop %v632
    %v634 = vmul.f32 %v629, %v633
    %v635 = vld [vmem:[#allocation2 + $0x40] sm:$0xff]
    %v636 = vld [vmem:[#allocation2 + $0x48] sm:$0xff]
    %v637 = vld [vmem:[#allocation2 + $0x50] sm:$0xff]
    %v638 = vld [vmem:[#allocation2 + $0x58] sm:$0xff]
    %v639 = vpack.c.bf16 %v634, %v634
    %640 = vmatpush.bf16.msra.mxu0 %v446
    %641 = vmatpush.bf16.msra.mxu0 %v442
    %642 = vmatpush.bf16.msra.mxu0 %v438
    %643 = vmatpush.bf16.msra.mxu0 %v434
    %644 = vmatpush.bf16.msra.mxu0 %v430
    %645 = vmatpush.bf16.msra.mxu0 %v426
    %646 = vmatpush.bf16.msra.mxu0 %v422
    %647 = vmatpush.bf16.msra.mxu0 %v418
    %648 = vmatmul.bf16.gmra.mxu0 %v639
    %v649 = vpop.f32.mrf.mxu0
    %v650 = vadd.f32 0.0, %v649
    %v651 = vpop.f32.mrf.mxu0
    %652 = vdwg.mxu0
    %653 = vmatpush.bf16.msra.mxu0 %v447
    %654 = vmatpush.bf16.msra.mxu0 %v443
    %655 = vmatpush.bf16.msra.mxu0 %v439
    %656 = vmatpush.bf16.msra.mxu0 %v435
    %657 = vmatpush.bf16.msra.mxu0 %v431
    %658 = vmatpush.bf16.msra.mxu0 %v427
    %659 = vmatpush.bf16.msra.mxu0 %v423
    %660 = vmatpush.bf16.msra.mxu0 %v419
    %661 = vmatmul.bf16.gmra.mxu0 %v639
    %v662 = vpop.f32.mrf.mxu0
    %v663 = vadd.f32 0.0, %v662
    %v664 = vpop.f32.mrf.mxu0
    %665 = vdwg.mxu0
    %666 = vmatpush.bf16.msra.mxu0 %v448
    %667 = vmatpush.bf16.msra.mxu0 %v444
    %668 = vmatpush.bf16.msra.mxu0 %v440
    %669 = vmatpush.bf16.msra.mxu0 %v436
    %670 = vmatpush.bf16.msra.mxu0 %v432
    %671 = vmatpush.bf16.msra.mxu0 %v428
    %672 = vmatpush.bf16.msra.mxu0 %v424
    %673 = vmatpush.bf16.msra.mxu0 %v420
    %674 = vmatmul.bf16.gmra.mxu0 %v639
    %v675 = vpop.f32.mrf.mxu0
    %v676 = vadd.f32 0.0, %v675
    %v677 = vpop.f32.mrf.mxu0
    %678 = vdwg.mxu0
    %679 = vmatpush.bf16.msra.mxu0 %v449
    %680 = vmatpush.bf16.msra.mxu0 %v445
    %681 = vmatpush.bf16.msra.mxu0 %v441
    %682 = vmatpush.bf16.msra.mxu0 %v437
    %683 = vmatpush.bf16.msra.mxu0 %v433
    %684 = vmatpush.bf16.msra.mxu0 %v429
    %685 = vmatpush.bf16.msra.mxu0 %v425
    %686 = vmatpush.bf16.msra.mxu0 %v421
    %687 = vmatmul.bf16.gmra.mxu0 %v639
    %v688 = vpop.f32.mrf.mxu0
    %v689 = vadd.f32 0.0, %v688
    %v690 = vpop.f32.mrf.mxu0
    %691 = vdwg.mxu0
    %v692 = vadd.f32 %v635, %v650
    %v693 = vadd.f32 %v636, %v663
    %v694 = vadd.f32 %v637, %v676
    %v695 = vadd.f32 %v638, %v689
    %v696 = vmul.f32 %v692, 0.5
    %v697 = vtanh.pop %v696
    %v698 = vmul.f32 %v697, 0.5
    %v699 = vadd.f32 %v698, 0.5
    %v700 = vmul.f32 %v693, 0.5
    %v701 = vtanh.pop %v700
    %v702 = vmul.f32 %v701, 0.5
    %v703 = vadd.f32 %v702, 0.5
    %v704 = vtanh.pop %v694
    %v705 = vmul.f32 %v695, 0.5
    %v706 = vtanh.pop %v705
    %v707 = vmul.f32 %v706, 0.5
    %v708 = vadd.f32 %v707, 0.5
    %v709 = vmul.f32 %v703, %v632
    %v710 = vmul.f32 %v699, %v704
    %v711 = vadd.f32 %v709, %v710
    %v712 = vtanh.pop %v711
    %v713 = vmul.f32 %v708, %v712
    %v714 = vld [vmem:[#allocation2 + $0x60] sm:$0xff]
    %v715 = vld [vmem:[#allocation2 + $0x68] sm:$0xff]
    %v716 = vld [vmem:[#allocation2 + $0x70] sm:$0xff]
    %v717 = vld [vmem:[#allocation2 + $0x78] sm:$0xff]
    %v718 = vpack.c.bf16 %v713, %v713
    %719 = vmatpush.bf16.msra.mxu0 %v446
    %720 = vmatpush.bf16.msra.mxu0 %v442
    %721 = vmatpush.bf16.msra.mxu0 %v438
    %722 = vmatpush.bf16.msra.mxu0 %v434
    %723 = vmatpush.bf16.msra.mxu0 %v430
    %724 = vmatpush.bf16.msra.mxu0 %v426
    %725 = vmatpush.bf16.msra.mxu0 %v422
    %726 = vmatpush.bf16.msra.mxu0 %v418
    %727 = vmatmul.bf16.gmra.mxu0 %v718
    %v728 = vpop.f32.mrf.mxu0
    %v729 = vadd.f32 0.0, %v728
    %v730 = vpop.f32.mrf.mxu0
    %731 = vdwg.mxu0
    %732 = vmatpush.bf16.msra.mxu0 %v447
    %733 = vmatpush.bf16.msra.mxu0 %v443
    %734 = vmatpush.bf16.msra.mxu0 %v439
    %735 = vmatpush.bf16.msra.mxu0 %v435
    %736 = vmatpush.bf16.msra.mxu0 %v431
    %737 = vmatpush.bf16.msra.mxu0 %v427
    %738 = vmatpush.bf16.msra.mxu0 %v423
    %739 = vmatpush.bf16.msra.mxu0 %v419
    %740 = vmatmul.bf16.gmra.mxu0 %v718
    %v741 = vpop.f32.mrf.mxu0
    %v742 = vadd.f32 0.0, %v741
    %v743 = vpop.f32.mrf.mxu0
    %744 = vdwg.mxu0
    %745 = vmatpush.bf16.msra.mxu0 %v448
    %746 = vmatpush.bf16.msra.mxu0 %v444
    %747 = vmatpush.bf16.msra.mxu0 %v440
    %748 = vmatpush.bf16.msra.mxu0 %v436
    %749 = vmatpush.bf16.msra.mxu0 %v432
    %750 = vmatpush.bf16.msra.mxu0 %v428
    %751 = vmatpush.bf16.msra.mxu0 %v424
    %752 = vmatpush.bf16.msra.mxu0 %v420
    %753 = vmatmul.bf16.gmra.mxu0 %v718
    %v754 = vpop.f32.mrf.mxu0
    %v755 = vadd.f32 0.0, %v754
    %v756 = vpop.f32.mrf.mxu0
    %757 = vdwg.mxu0
    %758 = vmatpush.bf16.msra.mxu0 %v449
    %759 = vmatpush.bf16.msra.mxu0 %v445
    %760 = vmatpush.bf16.msra.mxu0 %v441
    %761 = vmatpush.bf16.msra.mxu0 %v437
    %762 = vmatpush.bf16.msra.mxu0 %v433
    %763 = vmatpush.bf16.msra.mxu0 %v429
    %764 = vmatpush.bf16.msra.mxu0 %v425
    %765 = vmatpush.bf16.msra.mxu0 %v421
    %766 = vmatmul.bf16.gmra.mxu0 %v718
    %v767 = vpop.f32.mrf.mxu0
    %v768 = vadd.f32 0.0, %v767
    %v769 = vpop.f32.mrf.mxu0
    %770 = vdwg.mxu0
    %v771 = vadd.f32 %v714, %v729
    %v772 = vadd.f32 %v715, %v742
    %v773 = vadd.f32 %v716, %v755
    %v774 = vadd.f32 %v717, %v768
    %v775 = vmul.f32 %v771, 0.5
    %v776 = vtanh.pop %v775
    %v777 = vmul.f32 %v776, 0.5
    %v778 = vadd.f32 %v777, 0.5
    %v779 = vmul.f32 %v772, 0.5
    %v780 = vtanh.pop %v779
    %v781 = vmul.f32 %v780, 0.5
    %v782 = vadd.f32 %v781, 0.5
    %v783 = vtanh.pop %v773
    %v784 = vmul.f32 %v774, 0.5
    %v785 = vtanh.pop %v784
    %v786 = vmul.f32 %v785, 0.5
    %v787 = vadd.f32 %v786, 0.5
    %v788 = vmul.f32 %v782, %v711
    %v789 = vmul.f32 %v778, %v783
    %v790 = vadd.f32 %v788, %v789
    %v791 = vtanh.pop %v790
    %v792 = vmul.f32 %v787, %v791
    %v793 = vld [vmem:[#allocation2 + $0x80] sm:$0xff]
    %v794 = vld [vmem:[#allocation2 + $0x88] sm:$0xff]
    %v795 = vld [vmem:[#allocation2 + $0x90] sm:$0xff]
    %v796 = vld [vmem:[#allocation2 + $0x98] sm:$0xff]
    %v797 = vpack.c.bf16 %v792, %v792
    %798 = vmatpush.bf16.msra.mxu0 %v446
    %799 = vmatpush.bf16.msra.mxu0 %v442
    %800 = vmatpush.bf16.msra.mxu0 %v438
    %801 = vmatpush.bf16.msra.mxu0 %v434
    %802 = vmatpush.bf16.msra.mxu0 %v430
    %803 = vmatpush.bf16.msra.mxu0 %v426
    %804 = vmatpush.bf16.msra.mxu0 %v422
    %805 = vmatpush.bf16.msra.mxu0 %v418
    %806 = vmatmul.bf16.gmra.mxu0 %v797
    %v807 = vpop.f32.mrf.mxu0
    %v808 = vadd.f32 0.0, %v807
    %v809 = vpop.f32.mrf.mxu0
    %810 = vdwg.mxu0
    %811 = vmatpush.bf16.msra.mxu0 %v447
    %812 = vmatpush.bf16.msra.mxu0 %v443
    %813 = vmatpush.bf16.msra.mxu0 %v439
    %814 = vmatpush.bf16.msra.mxu0 %v435
    %815 = vmatpush.bf16.msra.mxu0 %v431
    %816 = vmatpush.bf16.msra.mxu0 %v427
    %817 = vmatpush.bf16.msra.mxu0 %v423
    %818 = vmatpush.bf16.msra.mxu0 %v419
    %819 = vmatmul.bf16.gmra.mxu0 %v797
    %v820 = vpop.f32.mrf.mxu0
    %v821 = vadd.f32 0.0, %v820
    %v822 = vpop.f32.mrf.mxu0
    %823 = vdwg.mxu0
    %824 = vmatpush.bf16.msra.mxu0 %v448
    %825 = vmatpush.bf16.msra.mxu0 %v444
    %826 = vmatpush.bf16.msra.mxu0 %v440
    %827 = vmatpush.bf16.msra.mxu0 %v436
    %828 = vmatpush.bf16.msra.mxu0 %v432
    %829 = vmatpush.bf16.msra.mxu0 %v428
    %830 = vmatpush.bf16.msra.mxu0 %v424
    %831 = vmatpush.bf16.msra.mxu0 %v420
    %832 = vmatmul.bf16.gmra.mxu0 %v797
    %v833 = vpop.f32.mrf.mxu0
    %v834 = vadd.f32 0.0, %v833
    %v835 = vpop.f32.mrf.mxu0
    %836 = vdwg.mxu0
    %837 = vmatpush.bf16.msra.mxu0 %v449
    %838 = vmatpush.bf16.msra.mxu0 %v445
    %839 = vmatpush.bf16.msra.mxu0 %v441
    %840 = vmatpush.bf16.msra.mxu0 %v437
    %841 = vmatpush.bf16.msra.mxu0 %v433
    %842 = vmatpush.bf16.msra.mxu0 %v429
    %843 = vmatpush.bf16.msra.mxu0 %v425
    %844 = vmatpush.bf16.msra.mxu0 %v421
    %845 = vmatmul.bf16.gmra.mxu0 %v797
    %v846 = vpop.f32.mrf.mxu0
    %v847 = vadd.f32 0.0, %v846
    %v848 = vpop.f32.mrf.mxu0
    %849 = vdwg.mxu0
    %v850 = vadd.f32 %v793, %v808
    %v851 = vadd.f32 %v794, %v821
    %v852 = vadd.f32 %v795, %v834
    %v853 = vadd.f32 %v796, %v847
    %v854 = vmul.f32 %v850, 0.5
    %v855 = vtanh.pop %v854
    %v856 = vmul.f32 %v855, 0.5
    %v857 = vadd.f32 %v856, 0.5
    %v858 = vmul.f32 %v851, 0.5
    %v859 = vtanh.pop %v858
    %v860 = vmul.f32 %v859, 0.5
    %v861 = vadd.f32 %v860, 0.5
    %v862 = vtanh.pop %v852
    %v863 = vmul.f32 %v853, 0.5
    %v864 = vtanh.pop %v863
    %v865 = vmul.f32 %v864, 0.5
    %v866 = vadd.f32 %v865, 0.5
    %v867 = vmul.f32 %v861, %v790
    %v868 = vmul.f32 %v857, %v862
    %v869 = vadd.f32 %v867, %v868
    %v870 = vtanh.pop %v869
    %v871 = vmul.f32 %v866, %v870
    %v872 = vld [vmem:[#allocation2 + $0xa0] sm:$0xff]
    %v873 = vld [vmem:[#allocation2 + $0xa8] sm:$0xff]
    %v874 = vld [vmem:[#allocation2 + $0xb0] sm:$0xff]
    %v875 = vld [vmem:[#allocation2 + $0xb8] sm:$0xff]
    %v876 = vpack.c.bf16 %v871, %v871
    %877 = vmatpush.bf16.msra.mxu0 %v446
    %878 = vmatpush.bf16.msra.mxu0 %v442
    %879 = vmatpush.bf16.msra.mxu0 %v438
    %880 = vmatpush.bf16.msra.mxu0 %v434
    %881 = vmatpush.bf16.msra.mxu0 %v430
    %882 = vmatpush.bf16.msra.mxu0 %v426
    %883 = vmatpush.bf16.msra.mxu0 %v422
    %884 = vmatpush.bf16.msra.mxu0 %v418
    %885 = vmatmul.bf16.gmra.mxu0 %v876
    %v886 = vpop.f32.mrf.mxu0
    %v887 = vadd.f32 0.0, %v886
    %v888 = vpop.f32.mrf.mxu0
    %889 = vdwg.mxu0
    %890 = vmatpush.bf16.msra.mxu0 %v447
    %891 = vmatpush.bf16.msra.mxu0 %v443
    %892 = vmatpush.bf16.msra.mxu0 %v439
    %893 = vmatpush.bf16.msra.mxu0 %v435
    %894 = vmatpush.bf16.msra.mxu0 %v431
    %895 = vmatpush.bf16.msra.mxu0 %v427
    %896 = vmatpush.bf16.msra.mxu0 %v423
    %897 = vmatpush.bf16.msra.mxu0 %v419
    %898 = vmatmul.bf16.gmra.mxu0 %v876
    %v899 = vpop.f32.mrf.mxu0
    %v900 = vadd.f32 0.0, %v899
    %v901 = vpop.f32.mrf.mxu0
    %902 = vdwg.mxu0
    %903 = vmatpush.bf16.msra.mxu0 %v448
    %904 = vmatpush.bf16.msra.mxu0 %v444
    %905 = vmatpush.bf16.msra.mxu0 %v440
    %906 = vmatpush.bf16.msra.mxu0 %v436
    %907 = vmatpush.bf16.msra.mxu0 %v432
    %908 = vmatpush.bf16.msra.mxu0 %v428
    %909 = vmatpush.bf16.msra.mxu0 %v424
    %910 = vmatpush.bf16.msra.mxu0 %v420
    %911 = vmatmul.bf16.gmra.mxu0 %v876
    %v912 = vpop.f32.mrf.mxu0
    %v913 = vadd.f32 0.0, %v912
    %v914 = vpop.f32.mrf.mxu0
    %915 = vdwg.mxu0
    %916 = vmatpush.bf16.msra.mxu0 %v449
    %917 = vmatpush.bf16.msra.mxu0 %v445
    %918 = vmatpush.bf16.msra.mxu0 %v441
    %919 = vmatpush.bf16.msra.mxu0 %v437
    %920 = vmatpush.bf16.msra.mxu0 %v433
    %921 = vmatpush.bf16.msra.mxu0 %v429
    %922 = vmatpush.bf16.msra.mxu0 %v425
    %923 = vmatpush.bf16.msra.mxu0 %v421
    %924 = vmatmul.bf16.gmra.mxu0 %v876
    %v925 = vpop.f32.mrf.mxu0
    %v926 = vadd.f32 0.0, %v925
    %v927 = vpop.f32.mrf.mxu0
    %928 = vdwg.mxu0
    %v929 = vadd.f32 %v872, %v887
    %v930 = vadd.f32 %v873, %v900
    %v931 = vadd.f32 %v874, %v913
    %v932 = vadd.f32 %v875, %v926
    %v933 = vmul.f32 %v929, 0.5
    %v934 = vtanh.pop %v933
    %v935 = vmul.f32 %v934, 0.5
    %v936 = vadd.f32 %v935, 0.5
    %v937 = vmul.f32 %v930, 0.5
    %v938 = vtanh.pop %v937
    %v939 = vmul.f32 %v938, 0.5
    %v940 = vadd.f32 %v939, 0.5
    %v941 = vtanh.pop %v931
    %v942 = vmul.f32 %v932, 0.5
    %v943 = vtanh.pop %v942
    %v944 = vmul.f32 %v943, 0.5
    %v945 = vadd.f32 %v944, 0.5
    %v946 = vmul.f32 %v940, %v869
    %v947 = vmul.f32 %v936, %v941
    %v948 = vadd.f32 %v946, %v947
    %v949 = vtanh.pop %v948
    %v950 = vmul.f32 %v945, %v949
    %v951 = vld [vmem:[#allocation2 + $0xc0] sm:$0xff]
    %v952 = vld [vmem:[#allocation2 + $0xc8] sm:$0xff]
    %v953 = vld [vmem:[#allocation2 + $0xd0] sm:$0xff]
    %v954 = vld [vmem:[#allocation2 + $0xd8] sm:$0xff]
    %v955 = vpack.c.bf16 %v950, %v950
    %956 = vmatpush.bf16.msra.mxu0 %v446
    %957 = vmatpush.bf16.msra.mxu0 %v442
    %958 = vmatpush.bf16.msra.mxu0 %v438
    %959 = vmatpush.bf16.msra.mxu0 %v434
    %960 = vmatpush.bf16.msra.mxu0 %v430
    %961 = vmatpush.bf16.msra.mxu0 %v426
    %962 = vmatpush.bf16.msra.mxu0 %v422
    %963 = vmatpush.bf16.msra.mxu0 %v418
    %964 = vmatmul.bf16.gmra.mxu0 %v955
    %v965 = vpop.f32.mrf.mxu0
    %v966 = vadd.f32 0.0, %v965
    %v967 = vpop.f32.mrf.mxu0
    %968 = vdwg.mxu0
    %969 = vmatpush.bf16.msra.mxu0 %v447
    %970 = vmatpush.bf16.msra.mxu0 %v443
    %971 = vmatpush.bf16.msra.mxu0 %v439
    %972 = vmatpush.bf16.msra.mxu0 %v435
    %973 = vmatpush.bf16.msra.mxu0 %v431
    %974 = vmatpush.bf16.msra.mxu0 %v427
    %975 = vmatpush.bf16.msra.mxu0 %v423
    %976 = vmatpush.bf16.msra.mxu0 %v419
    %977 = vmatmul.bf16.gmra.mxu0 %v955
    %v978 = vpop.f32.mrf.mxu0
    %v979 = vadd.f32 0.0, %v978
    %v980 = vpop.f32.mrf.mxu0
    %981 = vdwg.mxu0
    %982 = vmatpush.bf16.msra.mxu0 %v448
    %983 = vmatpush.bf16.msra.mxu0 %v444
    %984 = vmatpush.bf16.msra.mxu0 %v440
    %985 = vmatpush.bf16.msra.mxu0 %v436
    %986 = vmatpush.bf16.msra.mxu0 %v432
    %987 = vmatpush.bf16.msra.mxu0 %v428
    %988 = vmatpush.bf16.msra.mxu0 %v424
    %989 = vmatpush.bf16.msra.mxu0 %v420
    %990 = vmatmul.bf16.gmra.mxu0 %v955
    %v991 = vpop.f32.mrf.mxu0
    %v992 = vadd.f32 0.0, %v991
    %v993 = vpop.f32.mrf.mxu0
    %994 = vdwg.mxu0
    %995 = vmatpush.bf16.msra.mxu0 %v449
    %996 = vmatpush.bf16.msra.mxu0 %v445
    %997 = vmatpush.bf16.msra.mxu0 %v441
    %998 = vmatpush.bf16.msra.mxu0 %v437
    %999 = vmatpush.bf16.msra.mxu0 %v433
    %1000 = vmatpush.bf16.msra.mxu0 %v429
    %1001 = vmatpush.bf16.msra.mxu0 %v425
    %1002 = vmatpush.bf16.msra.mxu0 %v421
    %1003 = vmatmul.bf16.gmra.mxu0 %v955
    %v1004 = vpop.f32.mrf.mxu0
    %v1005 = vadd.f32 0.0, %v1004
    %v1006 = vpop.f32.mrf.mxu0
    %1007 = vdwg.mxu0
    %v1008 = vadd.f32 %v951, %v966
    %v1009 = vadd.f32 %v952, %v979
    %v1010 = vadd.f32 %v953, %v992
    %v1011 = vadd.f32 %v954, %v1005
    %v1012 = vmul.f32 %v1008, 0.5
    %v1013 = vtanh.pop %v1012
    %v1014 = vmul.f32 %v1013, 0.5
    %v1015 = vadd.f32 %v1014, 0.5
    %v1016 = vmul.f32 %v1009, 0.5
    %v1017 = vtanh.pop %v1016
    %v1018 = vmul.f32 %v1017, 0.5
    %v1019 = vadd.f32 %v1018, 0.5
    %v1020 = vtanh.pop %v1010
    %v1021 = vmul.f32 %v1011, 0.5
    %v1022 = vtanh.pop %v1021
    %v1023 = vmul.f32 %v1022, 0.5
    %v1024 = vadd.f32 %v1023, 0.5
    %v1025 = vmul.f32 %v1019, %v948
    %v1026 = vmul.f32 %v1015, %v1020
    %v1027 = vadd.f32 %v1025, %v1026
    %v1028 = vtanh.pop %v1027
    %v1029 = vmul.f32 %v1024, %v1028
    %v1030 = vld [vmem:[#allocation2 + $0xe0] sm:$0xff]
    %v1031 = vld [vmem:[#allocation2 + $0xe8] sm:$0xff]
    %v1032 = vld [vmem:[#allocation2 + $0xf0] sm:$0xff]
    %v1033 = vld [vmem:[#allocation2 + $0xf8] sm:$0xff]
    %v1034 = vpack.c.bf16 %v1029, %v1029
    %1035 = vmatpush.bf16.msra.mxu0 %v446
    %1036 = vmatpush.bf16.msra.mxu0 %v442
    %1037 = vmatpush.bf16.msra.mxu0 %v438
    %1038 = vmatpush.bf16.msra.mxu0 %v434
    %1039 = vmatpush.bf16.msra.mxu0 %v430
    %1040 = vmatpush.bf16.msra.mxu0 %v426
    %1041 = vmatpush.bf16.msra.mxu0 %v422
    %1042 = vmatpush.bf16.msra.mxu0 %v418
    %1043 = vmatmul.bf16.gmra.mxu0 %v1034
    %v1044 = vpop.f32.mrf.mxu0
    %v1045 = vadd.f32 0.0, %v1044
    %v1046 = vpop.f32.mrf.mxu0
    %1047 = vdwg.mxu0
    %1048 = vmatpush.bf16.msra.mxu0 %v447
    %1049 = vmatpush.bf16.msra.mxu0 %v443
    %1050 = vmatpush.bf16.msra.mxu0 %v439
    %1051 = vmatpush.bf16.msra.mxu0 %v435
    %1052 = vmatpush.bf16.msra.mxu0 %v431
    %1053 = vmatpush.bf16.msra.mxu0 %v427
    %1054 = vmatpush.bf16.msra.mxu0 %v423
    %1055 = vmatpush.bf16.msra.mxu0 %v419
    %1056 = vmatmul.bf16.gmra.mxu0 %v1034
    %v1057 = vpop.f32.mrf.mxu0
    %v1058 = vadd.f32 0.0, %v1057
    %v1059 = vpop.f32.mrf.mxu0
    %1060 = vdwg.mxu0
    %1061 = vmatpush.bf16.msra.mxu0 %v448
    %1062 = vmatpush.bf16.msra.mxu0 %v444
    %1063 = vmatpush.bf16.msra.mxu0 %v440
    %1064 = vmatpush.bf16.msra.mxu0 %v436
    %1065 = vmatpush.bf16.msra.mxu0 %v432
    %1066 = vmatpush.bf16.msra.mxu0 %v428
    %1067 = vmatpush.bf16.msra.mxu0 %v424
    %1068 = vmatpush.bf16.msra.mxu0 %v420
    %1069 = vmatmul.bf16.gmra.mxu0 %v1034
    %v1070 = vpop.f32.mrf.mxu0
    %v1071 = vadd.f32 0.0, %v1070
    %v1072 = vpop.f32.mrf.mxu0
    %1073 = vdwg.mxu0
    %1074 = vmatpush.bf16.msra.mxu0 %v449
    %1075 = vmatpush.bf16.msra.mxu0 %v445
    %1076 = vmatpush.bf16.msra.mxu0 %v441
    %1077 = vmatpush.bf16.msra.mxu0 %v437
    %1078 = vmatpush.bf16.msra.mxu0 %v433
    %1079 = vmatpush.bf16.msra.mxu0 %v429
    %1080 = vmatpush.bf16.msra.mxu0 %v425
    %1081 = vmatpush.bf16.msra.mxu0 %v421
    %1082 = vmatmul.bf16.gmra.mxu0 %v1034
    %v1083 = vpop.f32.mrf.mxu0
    %v1084 = vadd.f32 0.0, %v1083
    %v1085 = vpop.f32.mrf.mxu0
    %1086 = vdwg.mxu0
    %v1087 = vadd.f32 %v1030, %v1045
    %v1088 = vadd.f32 %v1031, %v1058
    %v1089 = vadd.f32 %v1032, %v1071
    %v1090 = vadd.f32 %v1033, %v1084
    %v1091 = vmul.f32 %v1087, 0.5
    %v1092 = vtanh.pop %v1091
    %v1093 = vmul.f32 %v1092, 0.5
    %v1094 = vadd.f32 %v1093, 0.5
    %v1095 = vmul.f32 %v1088, 0.5
    %v1096 = vtanh.pop %v1095
    %v1097 = vmul.f32 %v1096, 0.5
    %v1098 = vadd.f32 %v1097, 0.5
    %v1099 = vtanh.pop %v1089
    %v1100 = vmul.f32 %v1090, 0.5
    %v1101 = vtanh.pop %v1100
    %v1102 = vmul.f32 %v1101, 0.5
    %v1103 = vadd.f32 %v1102, 0.5
    %v1104 = vmul.f32 %v1098, %v1027
    %v1105 = vmul.f32 %v1094, %v1099
    %v1106 = vadd.f32 %v1104, %v1105
    %v1107 = vtanh.pop %v1106
    %v1108 = vmul.f32 %v1103, %v1107
    %v1109 = vpack.c.bf16 %v1108, %v1108
    %v1110 = vld [vmem:[%s3] sm:$0xf]
    %v1111 = vld [vmem:[%s3 + $0x4] sm:$0xf]
    %v1112 = vld [vmem:[%s3 + $0x8] sm:$0xf]
    %v1113 = vld [vmem:[%s3 + $0xc] sm:$0xf]
    %v1114 = vld [vmem:[%s3 + $0x10] sm:$0xf]
    %v1115 = vld [vmem:[%s3 + $0x14] sm:$0xf]
    %v1116 = vld [vmem:[%s3 + $0x18] sm:$0xf]
    %v1117 = vld [vmem:[%s3 + $0x1c] sm:$0xf]
    %v1118 = vld [vmem:[%s3 + $0x20] sm:$0xf]
    %v1119 = vld [vmem:[%s3 + $0x24] sm:$0xf]
    %v1120 = vld [vmem:[%s3 + $0x28] sm:$0xf]
    %v1121 = vld [vmem:[%s3 + $0x2c] sm:$0xf]
    %v1122 = vld [vmem:[%s3 + $0x30] sm:$0xf]
    %v1123 = vld [vmem:[%s3 + $0x34] sm:$0xf]
    %v1124 = vld [vmem:[%s3 + $0x38] sm:$0xf]
    %v1125 = vld [vmem:[%s3 + $0x3c] sm:$0xf]
    %v1126 = vld [vmem:[%s4] sm:$0x1]
    %v1128 = vperm.slane %v1126, 0
    %v1146 = vunpack.c.l.b16 %v1110
    %v1147 = vunpack.c.l.b16 %v1111
    %v1148 = vunpack.c.l.b16 %v1112
    %v1149 = vunpack.c.l.b16 %v1113
    %v1150 = vunpack.c.l.b16 %v1114
    %v1151 = vunpack.c.l.b16 %v1115
    %v1152 = vunpack.c.l.b16 %v1116
    %v1153 = vunpack.c.l.b16 %v1117
    %v1154 = vunpack.c.l.b16 %v1118
    %v1155 = vunpack.c.l.b16 %v1119
    %v1156 = vunpack.c.l.b16 %v1120
    %v1157 = vunpack.c.l.b16 %v1121
    %v1158 = vunpack.c.l.b16 %v1122
    %v1159 = vunpack.c.l.b16 %v1123
    %v1160 = vunpack.c.l.b16 %v1124
    %v1161 = vunpack.c.l.b16 %v1125
    %v1162 = vpack.c.b16 %v1147, %v1146
    %v1163 = vpack.c.b16 %v1149, %v1148
    %v1164 = vpack.c.b16 %v1151, %v1150
    %v1165 = vpack.c.b16 %v1153, %v1152
    %v1166 = vpack.c.b16 %v1155, %v1154
    %v1167 = vpack.c.b16 %v1157, %v1156
    %v1168 = vpack.c.b16 %v1159, %v1158
    %v1169 = vpack.c.b16 %v1161, %v1160
    %1178 = vmatpush.bf16.msra.mxu0 %v1169
    %1179 = vmatpush.bf16.msra.mxu0 %v1168
    %1180 = vmatpush.bf16.msra.mxu0 %v1167
    %1181 = vmatpush.bf16.msra.mxu0 %v1166
    %1182 = vmatpush.bf16.msra.mxu0 %v1165
    %1183 = vmatpush.bf16.msra.mxu0 %v1164
    %1184 = vmatpush.bf16.msra.mxu0 %v1163
    %1185 = vmatpush.bf16.msra.mxu0 %v1162
    %1186 = vmatmul.bf16.gmra.mxu0 %v1109
    %v1187 = vpop.f32.mrf.mxu0
    %v1188 = vadd.f32 %v1128, %v1187
    %v1189 = vpop.f32.mrf.mxu0
    %1190 = vdwg.mxu0
    %1191 = vst [vmem:[%s5] sm:$0xff] %v1188
    // Predicated region
    $region22: #{policy_network_forward.1} parent=1 // pred_check
      _
    $region23: #{policy_network_forward.1} parent=1 // pred_check_branch
      %1193 = sbr.rel (0) target = $region25
    $region24: #{policy_network_forward.1} parent=1 // pred_region
      _
    $region25: #{policy_network_forward.1} parent=1 // pred_fallthru
      _
    // Predicated region
    $region26: #{policy_network_forward.1} parent=1 // pred_check
      _
    $region27: #{policy_network_forward.1} parent=1 // pred_check_branch
      %1195 = sbr.rel (0) target = $region29
    $region28: #{policy_network_forward.1} parent=1 // pred_region
      _
    $region29: #{policy_network_forward.1} parent=1 // pred_fallthru
      _
    %1196 = vsyncpa [#allocation6], 1

</llo_original>
